<compile_context>
chip_gen: v7x
topology: tpu7x:2x2x1
jax: 0.10.0
libtpu: 0.0.40
codegen_flags: <defaults>
</compile_context>

<pallas_src>
import jax
import jax.numpy as jnp
from jax.experimental import pallas as pl
from jax.experimental.pallas import tpu as pltpu

HIDDEN = 128          # n_hidden in the original module

# node counts for the synthetic heterogeneous graph
NODE_TYPES = ('drug', 'protein', 'disease')
N_NODES = {'drug': 24, 'protein': 16, 'disease': 8}
N_PAD = 24            # common padded node count (multiple of 8)

# relation name -> (src node type, dst node type), mirroring the module
REL_SRC_DST = {
    'd-t-dr': ('disease', 'drug'),
    'd-m-dr': ('disease', 'drug'),
    'd-p':    ('disease', 'protein'),
    'dr-t-d': ('drug',    'disease'),
    'dr-m-d': ('drug',    'disease'),
    'p-d':    ('protein', 'disease'),
    'DDI':    ('drug',    'drug'),
    'PPI':    ('protein', 'protein'),
}

# relations ordered grouped by destination node type (accumulation groups)
REL_ORDER = (
    'd-t-dr', 'd-m-dr', 'DDI',      # dst = drug
    'd-p', 'PPI',                   # dst = protein
    'dr-t-d', 'dr-m-d', 'p-d',      # dst = disease
)


def hetero_sage_kernel(dst_ref, src_ref, first_ref,          # scalar prefetch
                       x_dst_ref, x_src_ref, adj_ref,
                       w_pool_ref, b_pool_ref,
                       w_self_ref, w_neigh_ref, b_ref,
                       out_ref):
    """Grid = (relations,). Accumulates HeteroGraphConv sum per dst group."""
    r = pl.program_id(0)

    # Start of a new destination-type group: zero the accumulator block.
    @pl.when(first_ref[r] == 1)
    def _():
        out_ref[...] = jnp.zeros_like(out_ref)

    # ---- pool MLP on source nodes: relu(X_src @ W_pool + b_pool) ----------
    # bf16 operands, f32 accumulation (native MXU dtype on v5e/v6e/v7x).
    x_src = x_src_ref[0].astype(jnp.bfloat16)                      # (N, H)
    pool = jnp.dot(x_src, w_pool_ref[0].astype(jnp.bfloat16),
                   preferred_element_type=jnp.float32)
    pool = jnp.maximum(pool + b_pool_ref[0], 0.0)                  # (N, H) >= 0

    # ---- max aggregation over in-neighbours --------------------------------
    adj = adj_ref[0]                                               # (N, N) 0/1
    # pool >= 0 (post-relu), so masking with 0 is equivalent to masking with
    # -inf, and zero-in-degree rows come out 0 (DGL's zero-fill behaviour).
    # Small static N -> unrolled 2D masked-max on the VPU.
    n_dst, n_src = adj.shape
    neigh = jnp.zeros((n_dst, pool.shape[1]), jnp.float32)
    for j in range(n_src):
        neigh = jnp.maximum(neigh, adj[:, j:j + 1] * pool[j:j + 1, :])

    # ---- fc_self(X_dst) + fc_neigh(neigh) + bias, relu ----------------------
    x_dst = x_dst_ref[0].astype(jnp.bfloat16)                      # (N, H)
    z = (jnp.dot(x_dst, w_self_ref[0].astype(jnp.bfloat16),
                 preferred_element_type=jnp.float32)
         + jnp.dot(neigh.astype(jnp.bfloat16),
                   w_neigh_ref[0].astype(jnp.bfloat16),
                   preferred_element_type=jnp.float32)
         + b_ref[0])
    out_ref[...] += jnp.maximum(z, 0.0)[None]


def build_static(adjs, params):
    """Stack relation metadata / adjacency / weights in REL_ORDER."""
    dst_idx, src_idx, first = [], [], []
    adj_stack = []
    prev_dst = None
    for rel in REL_ORDER:
        src, dst = REL_SRC_DST[rel]
        di, si = NODE_TYPES.index(dst), NODE_TYPES.index(src)
        dst_idx.append(di)
        src_idx.append(si)
        first.append(1 if di != prev_dst else 0)
        prev_dst = di
        a = adjs[rel]
        adj_stack.append(jnp.pad(
            a, ((0, N_PAD - a.shape[0]), (0, N_PAD - a.shape[1]))))

    dst_idx = jnp.asarray(dst_idx, jnp.int32)
    src_idx = jnp.asarray(src_idx, jnp.int32)
    first = jnp.asarray(first, jnp.int32)
    adj_all = jnp.stack(adj_stack)                               # (R, N, N)

    w_pool = jnp.stack([params[r]['w_pool'] for r in REL_ORDER])
    b_pool = jnp.stack([params[r]['b_pool'].reshape(1, HIDDEN)
                        for r in REL_ORDER])
    w_self = jnp.stack([params[r]['w_self'] for r in REL_ORDER])
    w_neigh = jnp.stack([params[r]['w_neigh'] for r in REL_ORDER])
    b = jnp.stack([params[r]['b'].reshape(1, HIDDEN) for r in REL_ORDER])
    return (dst_idx, src_idx, first), adj_all, (w_pool, b_pool, w_self,
                                                w_neigh, b)


def hetero_sage_layer(x_all, meta, adj_all, weights):
    """One HGCN layer on the padded (num_types, N_PAD, H) feature slab."""
    dst_idx, src_idx, first = meta
    w_pool, b_pool, w_self, w_neigh, b = weights
    n_rel = adj_all.shape[0]

    return pl.pallas_call(
        hetero_sage_kernel,
        out_shape=jax.ShapeDtypeStruct((len(NODE_TYPES), N_PAD, HIDDEN),
                                       jnp.float32),
        grid_spec=pltpu.PrefetchScalarGridSpec(
            num_scalar_prefetch=3,
            grid=(n_rel,),
            in_specs=[
                # X_dst: block picked by the relation's dst node type.
                pl.BlockSpec((1, N_PAD, HIDDEN),
                             lambda r, d, s, f: (d[r], 0, 0)),
                # X_src: block picked by the relation's src node type.
                pl.BlockSpec((1, N_PAD, HIDDEN),
                             lambda r, d, s, f: (s[r], 0, 0)),
                # adjacency (stacked per relation).
                pl.BlockSpec((1, N_PAD, N_PAD),
                             lambda r, d, s, f: (r, 0, 0)),
                # per-relation weights / biases.
                pl.BlockSpec((1, HIDDEN, HIDDEN),
                             lambda r, d, s, f: (r, 0, 0)),
                pl.BlockSpec((1, 1, HIDDEN),
                             lambda r, d, s, f: (r, 0, 0)),
                pl.BlockSpec((1, HIDDEN, HIDDEN),
                             lambda r, d, s, f: (r, 0, 0)),
                pl.BlockSpec((1, HIDDEN, HIDDEN),
                             lambda r, d, s, f: (r, 0, 0)),
                pl.BlockSpec((1, 1, HIDDEN),
                             lambda r, d, s, f: (r, 0, 0)),
            ],
            # Output block fixed across each dst group -> VMEM accumulator;
            # it only changes at group boundaries (relations grouped by dst).
            out_specs=pl.BlockSpec((1, N_PAD, HIDDEN),
                                   lambda r, d, s, f: (d[r], 0, 0)),
        ),
        compiler_params=pltpu.CompilerParams(
            dimension_semantics=("arbitrary",)),
    )(dst_idx, src_idx, first, x_all, x_all, adj_all,
      w_pool, b_pool, w_self, w_neigh, b)


@jax.jit
def all_graph_net_forward(h_dr, h_p, h_d, adjs, params):
    meta, adj_all, weights = build_static(adjs, params)

    def pad_rows(x):
        return jnp.pad(x, ((0, N_PAD - x.shape[0]), (0, 0)))

    x_all = jnp.stack([pad_rows(h_dr), pad_rows(h_p), pad_rows(h_d)])
    out1 = hetero_sage_layer(x_all, meta, adj_all, weights)   # shared weights,
    out2 = hetero_sage_layer(out1, meta, adj_all, weights)    # applied twice
    return (out1[0, :N_NODES['drug']], out1[1, :N_NODES['protein']],
            out2[0, :N_NODES['drug']], out2[1, :N_NODES['protein']])


# ---------------------------- pure-JAX reference ----------------------------
def sage_pool_ref(x_src, x_dst, adj, p):
    pool = jnp.maximum(x_src @ p['w_pool'] + p['b_pool'][None, :], 0.0)
    neigh = jnp.max(adj[:, :, None] * pool[None, :, :], axis=1)
    z = x_dst @ p['w_self'] + neigh @ p['w_neigh'] + p['b'][None, :]
    return jnp.maximum(z, 0.0)


def hetero_layer_ref(h, adjs, params):
    out = {t: jnp.zeros_like(h[t]) for t in NODE_TYPES}
    for rel, (src, dst) in REL_SRC_DST.items():
        out[dst] = out[dst] + sage_pool_ref(h[src], h[dst], adjs[rel],
                                            params[rel])
    return out


if __name__ == "__main__":
    key = jax.random.PRNGKey(0)
    kh, ka, kp = jax.random.split(key, 3)

    # deterministic node features
    kh_dr, kh_p, kh_d = jax.random.split(kh, 3)
    h_dr = jax.random.normal(kh_dr, (N_NODES['drug'], HIDDEN), jnp.float32)
    h_p = jax.random.normal(kh_p, (N_NODES['protein'], HIDDEN), jnp.float32)
    h_d = jax.random.normal(kh_d, (N_NODES['disease'], HIDDEN), jnp.float32)

    # deterministic per-relation dense adjacencies (dst x src, 0/1)
    adjs = {}
    for idx, (rel, (src, dst)) in enumerate(REL_SRC_DST.items()):
        kk = jax.random.fold_in(ka, idx)
        adjs[rel] = jax.random.bernoulli(
            kk, p=0.3, shape=(N_NODES[dst], N_NODES[src])).astype(jnp.float32)

    # deterministic per-relation SAGE parameters
    w_scale = 0.5 / (HIDDEN ** 0.5)
    params = {}
    for idx, rel in enumerate(REL_SRC_DST):
        k1, k2, k3, k4, k5 = jax.random.split(jax.random.fold_in(kp, idx), 5)
        params[rel] = {
            'w_pool': jax.random.normal(k1, (HIDDEN, HIDDEN), jnp.float32) * w_scale,
            'b_pool': jax.random.normal(k2, (HIDDEN,), jnp.float32) * 0.01,
            'w_self': jax.random.normal(k3, (HIDDEN, HIDDEN), jnp.float32) * w_scale,
            'w_neigh': jax.random.normal(k4, (HIDDEN, HIDDEN), jnp.float32) * w_scale,
            'b': jax.random.normal(k5, (HIDDEN,), jnp.float32) * 0.01,
        }

    outs = all_graph_net_forward(h_dr, h_p, h_d, adjs, params)
    outs = jax.block_until_ready(outs)
    h_dr1, h_p1, h_dr2, h_p2 = outs

    # pure-JAX f32 reference of the same forward pass
    h0 = {'drug': h_dr, 'protein': h_p, 'disease': h_d}
    r1 = hetero_layer_ref(h0, adjs, params)
    r2 = hetero_layer_ref(r1, adjs, params)
    refs = (r1['drug'], r1['protein'], r2['drug'], r2['protein'])

    assert h_dr1.shape == (N_NODES['drug'], HIDDEN)
    assert h_p1.shape == (N_NODES['protein'], HIDDEN)
    assert h_dr2.shape == (N_NODES['drug'], HIDDEN)
    assert h_p2.shape == (N_NODES['protein'], HIDDEN)
    # Kernel uses bf16 MXU operands (f32 accumulation); reference is pure f32,
    # so tolerance is sized for bf16 rounding compounded over two layers.
    for got, ref in zip(outs, refs):
        assert jnp.allclose(got, ref, rtol=1e-1, atol=1e-1), \
            float(jnp.max(jnp.abs(got - ref)))

    print("KERNEL_OK")
</pallas_src>

<mosaic_0001>
module attributes {stable_mosaic.version = 11 : i64} {
  func.func @hetero_sage_kernel(%arg0: i32, %arg1: memref<8xi32, #tpu.memory_space<smem>>, %arg2: memref<8xi32, #tpu.memory_space<smem>>, %arg3: memref<8xi32, #tpu.memory_space<smem>>, %arg4: memref<1x24x128xf32, #tpu.memory_space<vmem>>, %arg5: memref<1x24x128xf32, #tpu.memory_space<vmem>>, %arg6: memref<1x24x24xf32, #tpu.memory_space<vmem>>, %arg7: memref<1x128x128xf32, #tpu.memory_space<vmem>>, %arg8: memref<1x1x128xf32, #tpu.memory_space<vmem>>, %arg9: memref<1x128x128xf32, #tpu.memory_space<vmem>>, %arg10: memref<1x128x128xf32, #tpu.memory_space<vmem>>, %arg11: memref<1x1x128xf32, #tpu.memory_space<vmem>>, %arg12: memref<1x24x128xf32, #tpu.memory_space<vmem>>) attributes {dimension_semantics = [#tpu.dimension_semantics<arbitrary>], iteration_bounds = array<i64: 8>, scalar_prefetch = 3 : i64, scratch_operands = 0 : i64, tpu.core_type = #tpu.core_type<tc>, window_params = [{transform_indices = @transform_0, window_bounds = array<i64: 1, 24, 128>}, {transform_indices = @transform_1, window_bounds = array<i64: 1, 24, 128>}, {transform_indices = @transform_2, window_bounds = array<i64: 1, 24, 24>}, {transform_indices = @transform_3, window_bounds = array<i64: 1, 128, 128>}, {transform_indices = @transform_4, window_bounds = array<i64: 1, 1, 128>}, {transform_indices = @transform_5, window_bounds = array<i64: 1, 128, 128>}, {transform_indices = @transform_6, window_bounds = array<i64: 1, 128, 128>}, {transform_indices = @transform_7, window_bounds = array<i64: 1, 1, 128>}, {transform_indices = @transform_8, window_bounds = array<i64: 1, 24, 128>}]} {
    %0 = arith.index_cast %arg0 : i32 to index
    %1 = memref.load %arg3[%0] : memref<8xi32, #tpu.memory_space<smem>>
    %c1_i32 = arith.constant 1 : i32
    %2 = arith.cmpi eq, %1, %c1_i32 : i32
    %3 = arith.extui %2 : i1 to i32
    %c0_i32 = arith.constant 0 : i32
    %4 = arith.cmpi ne, %3, %c0_i32 : i32
    scf.if %4 {
      %cst_34 = arith.constant 0.000000e+00 : f32
      %188 = vector.broadcast %cst_34 : f32 to vector<1x24x128xf32>
      %c0_35 = arith.constant 0 : index
      %c0_36 = arith.constant 0 : index
      %c0_37 = arith.constant 0 : index
      %189 = vector.load %arg12[%c0_35, %c0_36, %c0_37] : memref<1x24x128xf32, #tpu.memory_space<vmem>>, vector<1x24x128xf32>
      tpu.vector_store %arg12[%c0_35, %c0_36, %c0_37], %188 {strides = array<i32>} : memref<1x24x128xf32, #tpu.memory_space<vmem>>, vector<1x24x128xf32>,
    } else {
    }
    %c0 = arith.constant 0 : index
    %c0_0 = arith.constant 0 : index
    %c0_1 = arith.constant 0 : index
    %5 = vector.load %arg5[%c0, %c0_0, %c0_1] : memref<1x24x128xf32, #tpu.memory_space<vmem>>, vector<1x24x128xf32>
    %6 = vector.shape_cast %5 : vector<1x24x128xf32> to vector<24x128xf32>
    %7 = arith.truncf %6 : vector<24x128xf32> to vector<24x128xbf16>
    %c0_2 = arith.constant 0 : index
    %c0_3 = arith.constant 0 : index
    %c0_4 = arith.constant 0 : index
    %8 = vector.load %arg7[%c0_2, %c0_3, %c0_4] : memref<1x128x128xf32, #tpu.memory_space<vmem>>, vector<1x128x128xf32>
    %9 = vector.shape_cast %8 : vector<1x128x128xf32> to vector<128x128xf32>
    %10 = arith.truncf %9 : vector<128x128xf32> to vector<128x128xbf16>
    %cst = arith.constant dense<0.000000e+00> : vector<24x128xf32>
    %11 = tpu.matmul %7, %10, %cst {dimension_numbers = #tpu.dot_dimension_numbers<[1], [0], [0], [1], [0, 0, 1, 1], [], []>} : vector<24x128xbf16>, vector<128x128xbf16>, vector<24x128xf32> -> vector<24x128xf32>
    %c0_5 = arith.constant 0 : index
    %c0_6 = arith.constant 0 : index
    %c0_7 = arith.constant 0 : index
    %12 = vector.load %arg8[%c0_5, %c0_6, %c0_7] : memref<1x1x128xf32, #tpu.memory_space<vmem>>, vector<1x1x128xf32>
    %13 = vector.shape_cast %12 : vector<1x1x128xf32> to vector<1x128xf32>
    %14 = vector.broadcast %13 : vector<1x128xf32> to vector<24x128xf32>
    %15 = arith.addf %11, %14 : vector<24x128xf32>
    %cst_8 = arith.constant 0.000000e+00 : f32
    %16 = vector.broadcast %cst_8 : f32 to vector<24x128xf32>
    %17 = arith.maximumf %15, %16 : vector<24x128xf32>
    %c0_9 = arith.constant 0 : index
    %c0_10 = arith.constant 0 : index
    %c0_11 = arith.constant 0 : index
    %18 = vector.load %arg6[%c0_9, %c0_10, %c0_11] : memref<1x24x24xf32, #tpu.memory_space<vmem>>, vector<1x24x24xf32>
    %19 = vector.shape_cast %18 : vector<1x24x24xf32> to vector<24x24xf32>
    %cst_12 = arith.constant 0.000000e+00 : f32
    %20 = vector.broadcast %cst_12 : f32 to vector<24x128xf32>
    %21 = vector.extract_strided_slice %19 {offsets = [0, 0], sizes = [24, 1], strides = [1, 1]} : vector<24x24xf32> to vector<24x1xf32>
    %22 = vector.extract_strided_slice %17 {offsets = [0, 0], sizes = [1, 128], strides = [1, 1]} : vector<24x128xf32> to vector<1x128xf32>
    %23 = vector.broadcast %21 : vector<24x1xf32> to vector<24x128xf32>
    %24 = vector.broadcast %22 : vector<1x128xf32> to vector<24x128xf32>
    %25 = arith.mulf %23, %24 : vector<24x128xf32>
    %26 = arith.maximumf %20, %25 : vector<24x128xf32>
    %27 = vector.extract_strided_slice %19 {offsets = [0, 1], sizes = [24, 1], strides = [1, 1]} : vector<24x24xf32> to vector<24x1xf32>
    %28 = vector.extract_strided_slice %17 {offsets = [1, 0], sizes = [1, 128], strides = [1, 1]} : vector<24x128xf32> to vector<1x128xf32>
    %29 = vector.broadcast %27 : vector<24x1xf32> to vector<24x128xf32>
    %30 = vector.broadcast %28 : vector<1x128xf32> to vector<24x128xf32>
    %31 = arith.mulf %29, %30 : vector<24x128xf32>
    %32 = arith.maximumf %26, %31 : vector<24x128xf32>
    %33 = vector.extract_strided_slice %19 {offsets = [0, 2], sizes = [24, 1], strides = [1, 1]} : vector<24x24xf32> to vector<24x1xf32>
    %34 = vector.extract_strided_slice %17 {offsets = [2, 0], sizes = [1, 128], strides = [1, 1]} : vector<24x128xf32> to vector<1x128xf32>
    %35 = vector.broadcast %33 : vector<24x1xf32> to vector<24x128xf32>
    %36 = vector.broadcast %34 : vector<1x128xf32> to vector<24x128xf32>
    %37 = arith.mulf %35, %36 : vector<24x128xf32>
    %38 = arith.maximumf %32, %37 : vector<24x128xf32>
    %39 = vector.extract_strided_slice %19 {offsets = [0, 3], sizes = [24, 1], strides = [1, 1]} : vector<24x24xf32> to vector<24x1xf32>
    %40 = vector.extract_strided_slice %17 {offsets = [3, 0], sizes = [1, 128], strides = [1, 1]} : vector<24x128xf32> to vector<1x128xf32>
    %41 = vector.broadcast %39 : vector<24x1xf32> to vector<24x128xf32>
    %42 = vector.broadcast %40 : vector<1x128xf32> to vector<24x128xf32>
    %43 = arith.mulf %41, %42 : vector<24x128xf32>
    %44 = arith.maximumf %38, %43 : vector<24x128xf32>
    %45 = vector.extract_strided_slice %19 {offsets = [0, 4], sizes = [24, 1], strides = [1, 1]} : vector<24x24xf32> to vector<24x1xf32>
    %46 = vector.extract_strided_slice %17 {offsets = [4, 0], sizes = [1, 128], strides = [1, 1]} : vector<24x128xf32> to vector<1x128xf32>
    %47 = vector.broadcast %45 : vector<24x1xf32> to vector<24x128xf32>
    %48 = vector.broadcast %46 : vector<1x128xf32> to vector<24x128xf32>
    %49 = arith.mulf %47, %48 : vector<24x128xf32>
    %50 = arith.maximumf %44, %49 : vector<24x128xf32>
    %51 = vector.extract_strided_slice %19 {offsets = [0, 5], sizes = [24, 1], strides = [1, 1]} : vector<24x24xf32> to vector<24x1xf32>
    %52 = vector.extract_strided_slice %17 {offsets = [5, 0], sizes = [1, 128], strides = [1, 1]} : vector<24x128xf32> to vector<1x128xf32>
    %53 = vector.broadcast %51 : vector<24x1xf32> to vector<24x128xf32>
    %54 = vector.broadcast %52 : vector<1x128xf32> to vector<24x128xf32>
    %55 = arith.mulf %53, %54 : vector<24x128xf32>
    %56 = arith.maximumf %50, %55 : vector<24x128xf32>
    %57 = vector.extract_strided_slice %19 {offsets = [0, 6], sizes = [24, 1], strides = [1, 1]} : vector<24x24xf32> to vector<24x1xf32>
    %58 = vector.extract_strided_slice %17 {offsets = [6, 0], sizes = [1, 128], strides = [1, 1]} : vector<24x128xf32> to vector<1x128xf32>
    %59 = vector.broadcast %57 : vector<24x1xf32> to vector<24x128xf32>
    %60 = vector.broadcast %58 : vector<1x128xf32> to vector<24x128xf32>
    %61 = arith.mulf %59, %60 : vector<24x128xf32>
    %62 = arith.maximumf %56, %61 : vector<24x128xf32>
    %63 = vector.extract_strided_slice %19 {offsets = [0, 7], sizes = [24, 1], strides = [1, 1]} : vector<24x24xf32> to vector<24x1xf32>
    %64 = vector.extract_strided_slice %17 {offsets = [7, 0], sizes = [1, 128], strides = [1, 1]} : vector<24x128xf32> to vector<1x128xf32>
    %65 = vector.broadcast %63 : vector<24x1xf32> to vector<24x128xf32>
    %66 = vector.broadcast %64 : vector<1x128xf32> to vector<24x128xf32>
    %67 = arith.mulf %65, %66 : vector<24x128xf32>
    %68 = arith.maximumf %62, %67 : vector<24x128xf32>
    %69 = vector.extract_strided_slice %19 {offsets = [0, 8], sizes = [24, 1], strides = [1, 1]} : vector<24x24xf32> to vector<24x1xf32>
    %70 = vector.extract_strided_slice %17 {offsets = [8, 0], sizes = [1, 128], strides = [1, 1]} : vector<24x128xf32> to vector<1x128xf32>
    %71 = vector.broadcast %69 : vector<24x1xf32> to vector<24x128xf32>
    %72 = vector.broadcast %70 : vector<1x128xf32> to vector<24x128xf32>
    %73 = arith.mulf %71, %72 : vector<24x128xf32>
    %74 = arith.maximumf %68, %73 : vector<24x128xf32>
    %75 = vector.extract_strided_slice %19 {offsets = [0, 9], sizes = [24, 1], strides = [1, 1]} : vector<24x24xf32> to vector<24x1xf32>
    %76 = vector.extract_strided_slice %17 {offsets = [9, 0], sizes = [1, 128], strides = [1, 1]} : vector<24x128xf32> to vector<1x128xf32>
    %77 = vector.broadcast %75 : vector<24x1xf32> to vector<24x128xf32>
    %78 = vector.broadcast %76 : vector<1x128xf32> to vector<24x128xf32>
    %79 = arith.mulf %77, %78 : vector<24x128xf32>
    %80 = arith.maximumf %74, %79 : vector<24x128xf32>
    %81 = vector.extract_strided_slice %19 {offsets = [0, 10], sizes = [24, 1], strides = [1, 1]} : vector<24x24xf32> to vector<24x1xf32>
    %82 = vector.extract_strided_slice %17 {offsets = [10, 0], sizes = [1, 128], strides = [1, 1]} : vector<24x128xf32> to vector<1x128xf32>
    %83 = vector.broadcast %81 : vector<24x1xf32> to vector<24x128xf32>
    %84 = vector.broadcast %82 : vector<1x128xf32> to vector<24x128xf32>
    %85 = arith.mulf %83, %84 : vector<24x128xf32>
    %86 = arith.maximumf %80, %85 : vector<24x128xf32>
    %87 = vector.extract_strided_slice %19 {offsets = [0, 11], sizes = [24, 1], strides = [1, 1]} : vector<24x24xf32> to vector<24x1xf32>
    %88 = vector.extract_strided_slice %17 {offsets = [11, 0], sizes = [1, 128], strides = [1, 1]} : vector<24x128xf32> to vector<1x128xf32>
    %89 = vector.broadcast %87 : vector<24x1xf32> to vector<24x128xf32>
    %90 = vector.broadcast %88 : vector<1x128xf32> to vector<24x128xf32>
    %91 = arith.mulf %89, %90 : vector<24x128xf32>
    %92 = arith.maximumf %86, %91 : vector<24x128xf32>
    %93 = vector.extract_strided_slice %19 {offsets = [0, 12], sizes = [24, 1], strides = [1, 1]} : vector<24x24xf32> to vector<24x1xf32>
    %94 = vector.extract_strided_slice %17 {offsets = [12, 0], sizes = [1, 128], strides = [1, 1]} : vector<24x128xf32> to vector<1x128xf32>
    %95 = vector.broadcast %93 : vector<24x1xf32> to vector<24x128xf32>
    %96 = vector.broadcast %94 : vector<1x128xf32> to vector<24x128xf32>
    %97 = arith.mulf %95, %96 : vector<24x128xf32>
    %98 = arith.maximumf %92, %97 : vector<24x128xf32>
    %99 = vector.extract_strided_slice %19 {offsets = [0, 13], sizes = [24, 1], strides = [1, 1]} : vector<24x24xf32> to vector<24x1xf32>
    %100 = vector.extract_strided_slice %17 {offsets = [13, 0], sizes = [1, 128], strides = [1, 1]} : vector<24x128xf32> to vector<1x128xf32>
    %101 = vector.broadcast %99 : vector<24x1xf32> to vector<24x128xf32>
    %102 = vector.broadcast %100 : vector<1x128xf32> to vector<24x128xf32>
    %103 = arith.mulf %101, %102 : vector<24x128xf32>
    %104 = arith.maximumf %98, %103 : vector<24x128xf32>
    %105 = vector.extract_strided_slice %19 {offsets = [0, 14], sizes = [24, 1], strides = [1, 1]} : vector<24x24xf32> to vector<24x1xf32>
    %106 = vector.extract_strided_slice %17 {offsets = [14, 0], sizes = [1, 128], strides = [1, 1]} : vector<24x128xf32> to vector<1x128xf32>
    %107 = vector.broadcast %105 : vector<24x1xf32> to vector<24x128xf32>
    %108 = vector.broadcast %106 : vector<1x128xf32> to vector<24x128xf32>
    %109 = arith.mulf %107, %108 : vector<24x128xf32>
    %110 = arith.maximumf %104, %109 : vector<24x128xf32>
    %111 = vector.extract_strided_slice %19 {offsets = [0, 15], sizes = [24, 1], strides = [1, 1]} : vector<24x24xf32> to vector<24x1xf32>
    %112 = vector.extract_strided_slice %17 {offsets = [15, 0], sizes = [1, 128], strides = [1, 1]} : vector<24x128xf32> to vector<1x128xf32>
    %113 = vector.broadcast %111 : vector<24x1xf32> to vector<24x128xf32>
    %114 = vector.broadcast %112 : vector<1x128xf32> to vector<24x128xf32>
    %115 = arith.mulf %113, %114 : vector<24x128xf32>
    %116 = arith.maximumf %110, %115 : vector<24x128xf32>
    %117 = vector.extract_strided_slice %19 {offsets = [0, 16], sizes = [24, 1], strides = [1, 1]} : vector<24x24xf32> to vector<24x1xf32>
    %118 = vector.extract_strided_slice %17 {offsets = [16, 0], sizes = [1, 128], strides = [1, 1]} : vector<24x128xf32> to vector<1x128xf32>
    %119 = vector.broadcast %117 : vector<24x1xf32> to vector<24x128xf32>
    %120 = vector.broadcast %118 : vector<1x128xf32> to vector<24x128xf32>
    %121 = arith.mulf %119, %120 : vector<24x128xf32>
    %122 = arith.maximumf %116, %121 : vector<24x128xf32>
    %123 = vector.extract_strided_slice %19 {offsets = [0, 17], sizes = [24, 1], strides = [1, 1]} : vector<24x24xf32> to vector<24x1xf32>
    %124 = vector.extract_strided_slice %17 {offsets = [17, 0], sizes = [1, 128], strides = [1, 1]} : vector<24x128xf32> to vector<1x128xf32>
    %125 = vector.broadcast %123 : vector<24x1xf32> to vector<24x128xf32>
    %126 = vector.broadcast %124 : vector<1x128xf32> to vector<24x128xf32>
    %127 = arith.mulf %125, %126 : vector<24x128xf32>
    %128 = arith.maximumf %122, %127 : vector<24x128xf32>
    %129 = vector.extract_strided_slice %19 {offsets = [0, 18], sizes = [24, 1], strides = [1, 1]} : vector<24x24xf32> to vector<24x1xf32>
    %130 = vector.extract_strided_slice %17 {offsets = [18, 0], sizes = [1, 128], strides = [1, 1]} : vector<24x128xf32> to vector<1x128xf32>
    %131 = vector.broadcast %129 : vector<24x1xf32> to vector<24x128xf32>
    %132 = vector.broadcast %130 : vector<1x128xf32> to vector<24x128xf32>
    %133 = arith.mulf %131, %132 : vector<24x128xf32>
    %134 = arith.maximumf %128, %133 : vector<24x128xf32>
    %135 = vector.extract_strided_slice %19 {offsets = [0, 19], sizes = [24, 1], strides = [1, 1]} : vector<24x24xf32> to vector<24x1xf32>
    %136 = vector.extract_strided_slice %17 {offsets = [19, 0], sizes = [1, 128], strides = [1, 1]} : vector<24x128xf32> to vector<1x128xf32>
    %137 = vector.broadcast %135 : vector<24x1xf32> to vector<24x128xf32>
    %138 = vector.broadcast %136 : vector<1x128xf32> to vector<24x128xf32>
    %139 = arith.mulf %137, %138 : vector<24x128xf32>
    %140 = arith.maximumf %134, %139 : vector<24x128xf32>
    %141 = vector.extract_strided_slice %19 {offsets = [0, 20], sizes = [24, 1], strides = [1, 1]} : vector<24x24xf32> to vector<24x1xf32>
    %142 = vector.extract_strided_slice %17 {offsets = [20, 0], sizes = [1, 128], strides = [1, 1]} : vector<24x128xf32> to vector<1x128xf32>
    %143 = vector.broadcast %141 : vector<24x1xf32> to vector<24x128xf32>
    %144 = vector.broadcast %142 : vector<1x128xf32> to vector<24x128xf32>
    %145 = arith.mulf %143, %144 : vector<24x128xf32>
    %146 = arith.maximumf %140, %145 : vector<24x128xf32>
    %147 = vector.extract_strided_slice %19 {offsets = [0, 21], sizes = [24, 1], strides = [1, 1]} : vector<24x24xf32> to vector<24x1xf32>
    %148 = vector.extract_strided_slice %17 {offsets = [21, 0], sizes = [1, 128], strides = [1, 1]} : vector<24x128xf32> to vector<1x128xf32>
    %149 = vector.broadcast %147 : vector<24x1xf32> to vector<24x128xf32>
    %150 = vector.broadcast %148 : vector<1x128xf32> to vector<24x128xf32>
    %151 = arith.mulf %149, %150 : vector<24x128xf32>
    %152 = arith.maximumf %146, %151 : vector<24x128xf32>
    %153 = vector.extract_strided_slice %19 {offsets = [0, 22], sizes = [24, 1], strides = [1, 1]} : vector<24x24xf32> to vector<24x1xf32>
    %154 = vector.extract_strided_slice %17 {offsets = [22, 0], sizes = [1, 128], strides = [1, 1]} : vector<24x128xf32> to vector<1x128xf32>
    %155 = vector.broadcast %153 : vector<24x1xf32> to vector<24x128xf32>
    %156 = vector.broadcast %154 : vector<1x128xf32> to vector<24x128xf32>
    %157 = arith.mulf %155, %156 : vector<24x128xf32>
    %158 = arith.maximumf %152, %157 : vector<24x128xf32>
    %159 = vector.extract_strided_slice %19 {offsets = [0, 23], sizes = [24, 1], strides = [1, 1]} : vector<24x24xf32> to vector<24x1xf32>
    %160 = vector.extract_strided_slice %17 {offsets = [23, 0], sizes = [1, 128], strides = [1, 1]} : vector<24x128xf32> to vector<1x128xf32>
    %161 = vector.broadcast %159 : vector<24x1xf32> to vector<24x128xf32>
    %162 = vector.broadcast %160 : vector<1x128xf32> to vector<24x128xf32>
    %163 = arith.mulf %161, %162 : vector<24x128xf32>
    %164 = arith.maximumf %158, %163 : vector<24x128xf32>
    %c0_13 = arith.constant 0 : index
    %c0_14 = arith.constant 0 : index
    %c0_15 = arith.constant 0 : index
    %165 = vector.load %arg4[%c0_13, %c0_14, %c0_15] : memref<1x24x128xf32, #tpu.memory_space<vmem>>, vector<1x24x128xf32>
    %166 = vector.shape_cast %165 : vector<1x24x128xf32> to vector<24x128xf32>
    %167 = arith.truncf %166 : vector<24x128xf32> to vector<24x128xbf16>
    %c0_16 = arith.constant 0 : index
    %c0_17 = arith.constant 0 : index
    %c0_18 = arith.constant 0 : index
    %168 = vector.load %arg9[%c0_16, %c0_17, %c0_18] : memref<1x128x128xf32, #tpu.memory_space<vmem>>, vector<1x128x128xf32>
    %169 = vector.shape_cast %168 : vector<1x128x128xf32> to vector<128x128xf32>
    %170 = arith.truncf %169 : vector<128x128xf32> to vector<128x128xbf16>
    %cst_19 = arith.constant dense<0.000000e+00> : vector<24x128xf32>
    %171 = tpu.matmul %167, %170, %cst_19 {dimension_numbers = #tpu.dot_dimension_numbers<[1], [0], [0], [1], [0, 0, 1, 1], [], []>} : vector<24x128xbf16>, vector<128x128xbf16>, vector<24x128xf32> -> vector<24x128xf32>
    %172 = arith.truncf %164 : vector<24x128xf32> to vector<24x128xbf16>
    %c0_20 = arith.constant 0 : index
    %c0_21 = arith.constant 0 : index
    %c0_22 = arith.constant 0 : index
    %173 = vector.load %arg10[%c0_20, %c0_21, %c0_22] : memref<1x128x128xf32, #tpu.memory_space<vmem>>, vector<1x128x128xf32>
    %174 = vector.shape_cast %173 : vector<1x128x128xf32> to vector<128x128xf32>
    %175 = arith.truncf %174 : vector<128x128xf32> to vector<128x128xbf16>
    %cst_23 = arith.constant dense<0.000000e+00> : vector<24x128xf32>
    %176 = tpu.matmul %172, %175, %cst_23 {dimension_numbers = #tpu.dot_dimension_numbers<[1], [0], [0], [1], [0, 0, 1, 1], [], []>} : vector<24x128xbf16>, vector<128x128xbf16>, vector<24x128xf32> -> vector<24x128xf32>
    %177 = arith.addf %171, %176 : vector<24x128xf32>
    %c0_24 = arith.constant 0 : index
    %c0_25 = arith.constant 0 : index
    %c0_26 = arith.constant 0 : index
    %178 = vector.load %arg11[%c0_24, %c0_25, %c0_26] : memref<1x1x128xf32, #tpu.memory_space<vmem>>, vector<1x1x128xf32>
    %179 = vector.shape_cast %178 : vector<1x1x128xf32> to vector<1x128xf32>
    %180 = vector.broadcast %179 : vector<1x128xf32> to vector<24x128xf32>
    %181 = arith.addf %177, %180 : vector<24x128xf32>
    %c0_27 = arith.constant 0 : index
    %c0_28 = arith.constant 0 : index
    %c0_29 = arith.constant 0 : index
    %182 = vector.load %arg12[%c0_27, %c0_28, %c0_29] : memref<1x24x128xf32, #tpu.memory_space<vmem>>, vector<1x24x128xf32>
    %cst_30 = arith.constant 0.000000e+00 : f32
    %183 = vector.broadcast %cst_30 : f32 to vector<24x128xf32>
    %184 = arith.maximumf %181, %183 : vector<24x128xf32>
    %185 = vector.shape_cast %184 : vector<24x128xf32> to vector<1x24x128xf32>
    %186 = arith.addf %182, %185 : vector<1x24x128xf32>
    %c0_31 = arith.constant 0 : index
    %c0_32 = arith.constant 0 : index
    %c0_33 = arith.constant 0 : index
    %187 = vector.load %arg12[%c0_31, %c0_32, %c0_33] : memref<1x24x128xf32, #tpu.memory_space<vmem>>, vector<1x24x128xf32>
    tpu.vector_store %arg12[%c0_31, %c0_32, %c0_33], %186 {strides = array<i32>} : memref<1x24x128xf32, #tpu.memory_space<vmem>>, vector<1x24x128xf32>,
    return
  }
  func.func @transform_0(%arg0: i32, %arg1: memref<8xi32, #tpu.memory_space<smem>>, %arg2: memref<8xi32, #tpu.memory_space<smem>>, %arg3: memref<8xi32, #tpu.memory_space<smem>>) -> (i32, i32, i32) {
    %0 = arith.index_cast %arg0 : i32 to index
    %1 = memref.load %arg1[%0] : memref<8xi32, #tpu.memory_space<smem>>
    %c0_i32 = arith.constant 0 : i32
    %c0_i32_0 = arith.constant 0 : i32
    %c0_i32_1 = arith.constant 0 : i32
    return %1, %c0_i32, %c0_i32_0 : i32, i32, i32
  }
  func.func @transform_1(%arg0: i32, %arg1: memref<8xi32, #tpu.memory_space<smem>>, %arg2: memref<8xi32, #tpu.memory_space<smem>>, %arg3: memref<8xi32, #tpu.memory_space<smem>>) -> (i32, i32, i32) {
    %0 = arith.index_cast %arg0 : i32 to index
    %1 = memref.load %arg2[%0] : memref<8xi32, #tpu.memory_space<smem>>
    %c0_i32 = arith.constant 0 : i32
    %c0_i32_0 = arith.constant 0 : i32
    %c0_i32_1 = arith.constant 0 : i32
    return %1, %c0_i32, %c0_i32_0 : i32, i32, i32
  }
  func.func @transform_2(%arg0: i32, %arg1: memref<8xi32, #tpu.memory_space<smem>>, %arg2: memref<8xi32, #tpu.memory_space<smem>>, %arg3: memref<8xi32, #tpu.memory_space<smem>>) -> (i32, i32, i32) {
    %c0_i32 = arith.constant 0 : i32
    %c0_i32_0 = arith.constant 0 : i32
    %c0_i32_1 = arith.constant 0 : i32
    return %arg0, %c0_i32, %c0_i32_0 : i32, i32, i32
  }
  func.func @transform_3(%arg0: i32, %arg1: memref<8xi32, #tpu.memory_space<smem>>, %arg2: memref<8xi32, #tpu.memory_space<smem>>, %arg3: memref<8xi32, #tpu.memory_space<smem>>) -> (i32, i32, i32) {
    %c0_i32 = arith.constant 0 : i32
    %c0_i32_0 = arith.constant 0 : i32
    %c0_i32_1 = arith.constant 0 : i32
    return %arg0, %c0_i32, %c0_i32_0 : i32, i32, i32
  }
  func.func @transform_4(%arg0: i32, %arg1: memref<8xi32, #tpu.memory_space<smem>>, %arg2: memref<8xi32, #tpu.memory_space<smem>>, %arg3: memref<8xi32, #tpu.memory_space<smem>>) -> (i32, i32, i32) {
    %c0_i32 = arith.constant 0 : i32
    %c0_i32_0 = arith.constant 0 : i32
    %c0_i32_1 = arith.constant 0 : i32
    return %arg0, %c0_i32, %c0_i32_0 : i32, i32, i32
  }
  func.func @transform_5(%arg0: i32, %arg1: memref<8xi32, #tpu.memory_space<smem>>, %arg2: memref<8xi32, #tpu.memory_space<smem>>, %arg3: memref<8xi32, #tpu.memory_space<smem>>) -> (i32, i32, i32) {
    %c0_i32 = arith.constant 0 : i32
    %c0_i32_0 = arith.constant 0 : i32
    %c0_i32_1 = arith.constant 0 : i32
    return %arg0, %c0_i32, %c0_i32_0 : i32, i32, i32
  }
  func.func @transform_6(%arg0: i32, %arg1: memref<8xi32, #tpu.memory_space<smem>>, %arg2: memref<8xi32, #tpu.memory_space<smem>>, %arg3: memref<8xi32, #tpu.memory_space<smem>>) -> (i32, i32, i32) {
    %c0_i32 = arith.constant 0 : i32
    %c0_i32_0 = arith.constant 0 : i32
    %c0_i32_1 = arith.constant 0 : i32
    return %arg0, %c0_i32, %c0_i32_0 : i32, i32, i32
  }
  func.func @transform_7(%arg0: i32, %arg1: memref<8xi32, #tpu.memory_space<smem>>, %arg2: memref<8xi32, #tpu.memory_space<smem>>, %arg3: memref<8xi32, #tpu.memory_space<smem>>) -> (i32, i32, i32) {
    %c0_i32 = arith.constant 0 : i32
    %c0_i32_0 = arith.constant 0 : i32
    %c0_i32_1 = arith.constant 0 : i32
    return %arg0, %c0_i32, %c0_i32_0 : i32, i32, i32
  }
  func.func @transform_8(%arg0: i32, %arg1: memref<8xi32, #tpu.memory_space<smem>>, %arg2: memref<8xi32, #tpu.memory_space<smem>>, %arg3: memref<8xi32, #tpu.memory_space<smem>>) -> (i32, i32, i32) {
    %0 = arith.index_cast %arg0 : i32 to index
    %1 = memref.load %arg1[%0] : memref<8xi32, #tpu.memory_space<smem>>
    %c0_i32 = arith.constant 0 : i32
    %c0_i32_0 = arith.constant 0 : i32
    %c0_i32_1 = arith.constant 0 : i32
    return %1, %c0_i32, %c0_i32_0 : i32, i32, i32
  }
}

</mosaic_0001>

<llo_original>
// kernel: all_graph_net_forward.2
$region0: #{all_graph_net_forward.2}
  #allocation0 [shape = 'u32[]', space=smem, size = 0x4, offset = 0x4, fixed_abs, tag = 'smem constant byte address 0x4 - core index']
  #allocation1 [shape = 'u32[144,128]{1,0:T(1,128)}', space=vmem, size = 0x12000, scoped, tag = 'internal scratch']
  #allocation2 [shape = 's32[1]{0}', space=sflag, size = 0x4, scoped, tag = 'scoped memory for all_graph_net_forward.2']
  #allocation3 [shape = 'u8[512]{0}', space=smem, size = 0x200, scoped, tag = 'prefetched SMEM operand 0']
  #allocation4 [shape = 'u8[512]{0}', space=smem, size = 0x200, scoped, tag = 'prefetched SMEM operand 1']
  #allocation5 [shape = 'u8[512]{0}', space=smem, size = 0x200, scoped, tag = 'prefetched SMEM operand 2']
  %s0 = inlined_call_operand.vmem [shape: s32[8], index: 0, kind: input, shape index: {}]
  %s1 = inlined_call_operand.vmem [shape: s32[8], index: 1, kind: input, shape index: {}]
  %s2 = inlined_call_operand.vmem [shape: s32[8], index: 2, kind: input, shape index: {}]
  %s3 = inlined_call_operand.vmem [shape: f32[3,24,128], index: 3, kind: input, shape index: {}, may-alias: {3,4}]
  %s4 = inlined_call_operand.vmem [shape: f32[3,24,128], index: 4, kind: input, shape index: {}, may-alias: {3,4}]
  %s5 = inlined_call_operand.vmem [shape: f32[8,24,24], index: 5, kind: input, shape index: {}]
  %s6 = inlined_call_operand.vmem [shape: f32[8,128,128], index: 6, kind: input, shape index: {}]
  %s7 = inlined_call_operand.vmem [shape: f32[8,1,128], index: 7, kind: input, shape index: {}]
  %s8 = inlined_call_operand.vmem [shape: f32[8,128,128], index: 8, kind: input, shape index: {}]
  %s9 = inlined_call_operand.vmem [shape: f32[8,128,128], index: 9, kind: input, shape index: {}]
  %s10 = inlined_call_operand.vmem [shape: f32[8,1,128], index: 10, kind: input, shape index: {}]
  %s11 = inlined_call_operand.vmem [shape: f32[3,24,128], index: 11, kind: output, shape index: {}]
  %s12 = sld [smem:[#allocation0]]
  $region69: #{all_graph_net_forward.2} parent=0
    _
  %s14 = ssub.s32 1, %s12
  %s15 = scalar_select 0, %s14, %s12
  %s16 = sshll.u32 %s0, 4
  %s17 = int_to_ptr.vmem [resolvable:$true] %s16
  %19 = dma.vmem_to_smem %s17, 16, [#allocation3], [#allocation2]
  %s20 = sshll.u32 %s1, 4
  %s21 = int_to_ptr.vmem [resolvable:$true] %s20
  %23 = dma.vmem_to_smem %s21, 16, [#allocation4], [#allocation2]
  %s24 = sshll.u32 %s2, 4
  %s25 = int_to_ptr.vmem [resolvable:$true] %s24
  %27 = dma.vmem_to_smem %s25, 16, [#allocation5], [#allocation2]
  %28 = dma.done [#allocation2], 48
  %29 = sfence
  loop: start=0, step=1, limit=10
  $region2: #{all_graph_net_forward.2} parent=0 // loop_pre_header
    _
  $region3: #{all_graph_net_forward.2} parent=0 // loop_header
    %s31 = sphi 0, %s35
    %p32 = scmp.ge.s32.totalorder %s31, 10
    %s43 = sphi 0, %s45
    %s46 = sphi 0, %s43
    %s47 = sphi 0, %s46
    %s63 = sphi 0, %s47
    %s71 = sphi 0, %s73
    %s74 = sphi 0, %s71
    %s75 = sphi 0, %s74
    %s91 = sphi 0, %s75
    %s97 = sphi 0, %s99
    %s100 = sphi 0, %s97
    %s101 = sphi 0, %s100
    %s117 = sphi 0, %s101
    %s123 = sphi 0, %s125
    %s126 = sphi 0, %s123
    %s127 = sphi 0, %s126
    %s143 = sphi 0, %s127
    %s149 = sphi 0, %s151
    %s152 = sphi 0, %s149
    %s153 = sphi 0, %s152
    %s169 = sphi 0, %s153
    %s175 = sphi 0, %s177
    %s178 = sphi 0, %s175
    %s179 = sphi 0, %s178
    %s195 = sphi 0, %s179
    %s201 = sphi 0, %s203
    %s204 = sphi 0, %s201
    %s205 = sphi 0, %s204
    %s221 = sphi 0, %s205
    %s227 = sphi 0, %s229
    %s230 = sphi 0, %s227
    %s231 = sphi 0, %s230
    %s247 = sphi 0, %s231
    %s255 = sphi 0, %s257
    %s258 = sphi 0, %s255
    %s259 = sphi 0, %s258
    %s275 = sphi 0, %s259
  $region4: #{all_graph_net_forward.2} parent=0 // loop_header_branch
    %34 = sbr.rel (%p32) target = $region8
  $region5: #{all_graph_net_forward.2} parent=0 // loop_body
    %s36 = ssub.s32 %s31, 1
    %s37 = ssub.s32 %s31, 2
    %s38 = sadd.s32 %s31, 1
    %s39 = sld [smem:[#allocation3 + %s31]]
    %s40 = sld [smem:[#allocation3 + %s38]]
    %s41 = ssub.s32 %s39, %s40
    %p42 = scmp.eq.s32.totalorder %s41, 0
    %s44 = sadd.s32 %s43, 1
    %s45 = scalar_select %p42, %s43, %s44
    %p48 = pneg %p42
    %p49 = scmp.eq.s32.totalorder %s31, 7
    %p50 = por %p48, %p49
    %p51 = scmp.ne.s32.totalorder %s43, %s46
    %p52 = scmp.eq.s32.totalorder %s31, 0
    %p53 = por %p51, %p52
    %p54 = scmp.ne.s32.totalorder %s43, %s46
    %p55 = scmp.eq.s32.totalorder %s36, 7
    %p56 = por %p54, %p55
    %p57 = scmp.ne.s32.totalorder %s46, %s47
    %p58 = scmp.eq.s32.totalorder %s36, 0
    %p59 = por %p57, %p58
    %p60 = scmp.ne.s32.totalorder %s46, %s47
    %p61 = scmp.eq.s32.totalorder %s37, 7
    %p62 = por %p60, %p61
    %p64 = scmp.ne.s32.totalorder %s47, %s63
    %p65 = scmp.eq.s32.totalorder %s37, 0
    %p66 = por %p64, %p65
    %s67 = sld [smem:[#allocation4 + %s31]]
    %s68 = sld [smem:[#allocation4 + %s38]]
    %s69 = ssub.s32 %s67, %s68
    %p70 = scmp.eq.s32.totalorder %s69, 0
    %s72 = sadd.s32 %s71, 1
    %s73 = scalar_select %p70, %s71, %s72
    %p76 = pneg %p70
    %p77 = scmp.eq.s32.totalorder %s31, 7
    %p78 = por %p76, %p77
    %p79 = scmp.ne.s32.totalorder %s71, %s74
    %p80 = scmp.eq.s32.totalorder %s31, 0
    %p81 = por %p79, %p80
    %p82 = scmp.ne.s32.totalorder %s71, %s74
    %p83 = scmp.eq.s32.totalorder %s36, 7
    %p84 = por %p82, %p83
    %p85 = scmp.ne.s32.totalorder %s74, %s75
    %p86 = scmp.eq.s32.totalorder %s36, 0
    %p87 = por %p85, %p86
    %p88 = scmp.ne.s32.totalorder %s74, %s75
    %p89 = scmp.eq.s32.totalorder %s37, 7
    %p90 = por %p88, %p89
    %p92 = scmp.ne.s32.totalorder %s75, %s91
    %p93 = scmp.eq.s32.totalorder %s37, 0
    %p94 = por %p92, %p93
    %s95 = ssub.s32 %s31, %s38
    %p96 = scmp.eq.s32.totalorder %s95, 0
    %s98 = sadd.s32 %s97, 1
    %s99 = scalar_select %p96, %s97, %s98
    %p102 = pneg %p96
    %p103 = scmp.eq.s32.totalorder %s31, 7
    %p104 = por %p102, %p103
    %p105 = scmp.ne.s32.totalorder %s97, %s100
    %p106 = scmp.eq.s32.totalorder %s31, 0
    %p107 = por %p105, %p106
    %p108 = scmp.ne.s32.totalorder %s97, %s100
    %p109 = scmp.eq.s32.totalorder %s36, 7
    %p110 = por %p108, %p109
    %p111 = scmp.ne.s32.totalorder %s100, %s101
    %p112 = scmp.eq.s32.totalorder %s36, 0
    %p113 = por %p111, %p112
    %p114 = scmp.ne.s32.totalorder %s100, %s101
    %p115 = scmp.eq.s32.totalorder %s37, 7
    %p116 = por %p114, %p115
    %p118 = scmp.ne.s32.totalorder %s101, %s117
    %p119 = scmp.eq.s32.totalorder %s37, 0
    %p120 = por %p118, %p119
    %s121 = ssub.s32 %s31, %s38
    %p122 = scmp.eq.s32.totalorder %s121, 0
    %s124 = sadd.s32 %s123, 1
    %s125 = scalar_select %p122, %s123, %s124
    %p128 = pneg %p122
    %p129 = scmp.eq.s32.totalorder %s31, 7
    %p130 = por %p128, %p129
    %p131 = scmp.ne.s32.totalorder %s123, %s126
    %p132 = scmp.eq.s32.totalorder %s31, 0
    %p133 = por %p131, %p132
    %p134 = scmp.ne.s32.totalorder %s123, %s126
    %p135 = scmp.eq.s32.totalorder %s36, 7
    %p136 = por %p134, %p135
    %p137 = scmp.ne.s32.totalorder %s126, %s127
    %p138 = scmp.eq.s32.totalorder %s36, 0
    %p139 = por %p137, %p138
    %p140 = scmp.ne.s32.totalorder %s126, %s127
    %p141 = scmp.eq.s32.totalorder %s37, 7
    %p142 = por %p140, %p141
    %p144 = scmp.ne.s32.totalorder %s127, %s143
    %p145 = scmp.eq.s32.totalorder %s37, 0
    %p146 = por %p144, %p145
    %s147 = ssub.s32 %s31, %s38
    %p148 = scmp.eq.s32.totalorder %s147, 0
    %s150 = sadd.s32 %s149, 1
    %s151 = scalar_select %p148, %s149, %s150
    %p154 = pneg %p148
    %p155 = scmp.eq.s32.totalorder %s31, 7
    %p156 = por %p154, %p155
    %p157 = scmp.ne.s32.totalorder %s149, %s152
    %p158 = scmp.eq.s32.totalorder %s31, 0
    %p159 = por %p157, %p158
    %p160 = scmp.ne.s32.totalorder %s149, %s152
    %p161 = scmp.eq.s32.totalorder %s36, 7
    %p162 = por %p160, %p161
    %p163 = scmp.ne.s32.totalorder %s152, %s153
    %p164 = scmp.eq.s32.totalorder %s36, 0
    %p165 = por %p163, %p164
    %p166 = scmp.ne.s32.totalorder %s152, %s153
    %p167 = scmp.eq.s32.totalorder %s37, 7
    %p168 = por %p166, %p167
    %p170 = scmp.ne.s32.totalorder %s153, %s169
    %p171 = scmp.eq.s32.totalorder %s37, 0
    %p172 = por %p170, %p171
    %s173 = ssub.s32 %s31, %s38
    %p174 = scmp.eq.s32.totalorder %s173, 0
    %s176 = sadd.s32 %s175, 1
    %s177 = scalar_select %p174, %s175, %s176
    %p180 = pneg %p174
    %p181 = scmp.eq.s32.totalorder %s31, 7
    %p182 = por %p180, %p181
    %p183 = scmp.ne.s32.totalorder %s175, %s178
    %p184 = scmp.eq.s32.totalorder %s31, 0
    %p185 = por %p183, %p184
    %p186 = scmp.ne.s32.totalorder %s175, %s178
    %p187 = scmp.eq.s32.totalorder %s36, 7
    %p188 = por %p186, %p187
    %p189 = scmp.ne.s32.totalorder %s178, %s179
    %p190 = scmp.eq.s32.totalorder %s36, 0
    %p191 = por %p189, %p190
    %p192 = scmp.ne.s32.totalorder %s178, %s179
    %p193 = scmp.eq.s32.totalorder %s37, 7
    %p194 = por %p192, %p193
    %p196 = scmp.ne.s32.totalorder %s179, %s195
    %p197 = scmp.eq.s32.totalorder %s37, 0
    %p198 = por %p196, %p197
    %s199 = ssub.s32 %s31, %s38
    %p200 = scmp.eq.s32.totalorder %s199, 0
    %s202 = sadd.s32 %s201, 1
    %s203 = scalar_select %p200, %s201, %s202
    %p206 = pneg %p200
    %p207 = scmp.eq.s32.totalorder %s31, 7
    %p208 = por %p206, %p207
    %p209 = scmp.ne.s32.totalorder %s201, %s204
    %p210 = scmp.eq.s32.totalorder %s31, 0
    %p211 = por %p209, %p210
    %p212 = scmp.ne.s32.totalorder %s201, %s204
    %p213 = scmp.eq.s32.totalorder %s36, 7
    %p214 = por %p212, %p213
    %p215 = scmp.ne.s32.totalorder %s204, %s205
    %p216 = scmp.eq.s32.totalorder %s36, 0
    %p217 = por %p215, %p216
    %p218 = scmp.ne.s32.totalorder %s204, %s205
    %p219 = scmp.eq.s32.totalorder %s37, 7
    %p220 = por %p218, %p219
    %p222 = scmp.ne.s32.totalorder %s205, %s221
    %p223 = scmp.eq.s32.totalorder %s37, 0
    %p224 = por %p222, %p223
    %s225 = ssub.s32 %s31, %s38
    %p226 = scmp.eq.s32.totalorder %s225, 0
    %s228 = sadd.s32 %s227, 1
    %s229 = scalar_select %p226, %s227, %s228
    %p232 = pneg %p226
    %p233 = scmp.eq.s32.totalorder %s31, 7
    %p234 = por %p232, %p233
    %p235 = scmp.ne.s32.totalorder %s227, %s230
    %p236 = scmp.eq.s32.totalorder %s31, 0
    %p237 = por %p235, %p236
    %p238 = scmp.ne.s32.totalorder %s227, %s230
    %p239 = scmp.eq.s32.totalorder %s36, 7
    %p240 = por %p238, %p239
    %p241 = scmp.ne.s32.totalorder %s230, %s231
    %p242 = scmp.eq.s32.totalorder %s36, 0
    %p243 = por %p241, %p242
    %p244 = scmp.ne.s32.totalorder %s230, %s231
    %p245 = scmp.eq.s32.totalorder %s37, 7
    %p246 = por %p244, %p245
    %p248 = scmp.ne.s32.totalorder %s231, %s247
    %p249 = scmp.eq.s32.totalorder %s37, 0
    %p250 = por %p248, %p249
    %s251 = sld [smem:[#allocation3 + %s31]]
    %s252 = sld [smem:[#allocation3 + %s38]]
    %s253 = ssub.s32 %s251, %s252
    %p254 = scmp.eq.s32.totalorder %s253, 0
    %s256 = sadd.s32 %s255, 1
    %s257 = scalar_select %p254, %s255, %s256
    %p260 = pneg %p254
    %p261 = scmp.eq.s32.totalorder %s31, 7
    %p262 = por %p260, %p261
    %p263 = scmp.ne.s32.totalorder %s255, %s258
    %p264 = scmp.eq.s32.totalorder %s31, 0
    %p265 = por %p263, %p264
    %p266 = scmp.ne.s32.totalorder %s255, %s258
    %p267 = scmp.eq.s32.totalorder %s36, 7
    %p268 = por %p266, %p267
    %p269 = scmp.ne.s32.totalorder %s258, %s259
    %p270 = scmp.eq.s32.totalorder %s36, 0
    %p271 = por %p269, %p270
    %p272 = scmp.ne.s32.totalorder %s258, %s259
    %p273 = scmp.eq.s32.totalorder %s37, 7
    %p274 = por %p272, %p273
    %p276 = scmp.ne.s32.totalorder %s259, %s275
    %p277 = scmp.eq.s32.totalorder %s37, 0
    %p278 = por %p276, %p277
    %p279 = scmp.le.s32.totalorder 1, %s31
    %p280 = scmp.lt.s32.totalorder %s31, 9
    %p281 = pnand %p279, %p280
    %p282 = pneg %p281
    // Predicated region
    $region9: #{all_graph_net_forward.2} parent=5 // pred_check
      _
    $region10: #{all_graph_net_forward.2} parent=5 // pred_check_branch
      %284 = sbr.rel (%p281) target = $region12
    $region11: #{all_graph_net_forward.2} parent=5 // pred_region
      %s285 = ssub.s32 %s31, 1
    $region12: #{all_graph_net_forward.2} parent=5 // pred_fallthru
      _
    %p286 = scmp.lt.s32.totalorder %s31, 8
    // Predicated region
    $region13: #{all_graph_net_forward.2} parent=5 // pred_check
      %p287 = pneg %p286
    $region14: #{all_graph_net_forward.2} parent=5 // pred_check_branch
      %289 = sbr.rel (%p287) target = $region16
    $region15: #{all_graph_net_forward.2} parent=5 // pred_region
      // Predicated region
      $region17: #{all_graph_net_forward.2} parent=15 // pred_check
        %p290 = pneg %p53
      $region18: #{all_graph_net_forward.2} parent=15 // pred_check_branch
        %292 = sbr.rel (%p290) target = $region20
      $region19: #{all_graph_net_forward.2} parent=15 // pred_region
        %s293 = sld [smem:[#allocation3 + %s31]]
        %p294 = scmp.lt.s32.totalorder %s293, 2
        %s295 = scalar_select %p294, %s293, 2
        %s296 = smul.addr %s295, 3
        %s297 = smul.addr %s296, 8
        %s298 = scalar_lea.vmem %s3, %s297
        %s299 = sld [smem:[#allocation3 + %s31]]
      $region20: #{all_graph_net_forward.2} parent=15 // pred_fallthru
        _
      // Predicated region
      $region21: #{all_graph_net_forward.2} parent=15 // pred_check
        %p300 = pneg %p81
      $region22: #{all_graph_net_forward.2} parent=15 // pred_check_branch
        %302 = sbr.rel (%p300) target = $region24
      $region23: #{all_graph_net_forward.2} parent=15 // pred_region
        %s303 = sld [smem:[#allocation4 + %s31]]
        %p304 = scmp.lt.s32.totalorder %s303, 2
        %s305 = scalar_select %p304, %s303, 2
        %s306 = smul.addr %s305, 3
        %s307 = smul.addr %s306, 8
        %s308 = scalar_lea.vmem %s4, %s307
        %s309 = sld [smem:[#allocation4 + %s31]]
      $region24: #{all_graph_net_forward.2} parent=15 // pred_fallthru
        _
      // Predicated region
      $region25: #{all_graph_net_forward.2} parent=15 // pred_check
        %p310 = pneg %p107
      $region26: #{all_graph_net_forward.2} parent=15 // pred_check_branch
        %312 = sbr.rel (%p310) target = $region28
      $region27: #{all_graph_net_forward.2} parent=15 // pred_region
        %p313 = scmp.lt.s32.totalorder %s31, 7
        %s314 = scalar_select %p313, %s31, 7
        %s315 = smul.addr %s314, 3
        %s316 = smul.addr %s315, 8
        %s317 = scalar_lea.vmem %s5, %s316
      $region28: #{all_graph_net_forward.2} parent=15 // pred_fallthru
        _
      // Predicated region
      $region29: #{all_graph_net_forward.2} parent=15 // pred_check
        %p318 = pneg %p133
      $region30: #{all_graph_net_forward.2} parent=15 // pred_check_branch
        %320 = sbr.rel (%p318) target = $region32
      $region31: #{all_graph_net_forward.2} parent=15 // pred_region
        %p321 = scmp.lt.s32.totalorder %s31, 7
        %s322 = scalar_select %p321, %s31, 7
        %s323 = smul.addr %s322, 16
        %s324 = smul.addr %s323, 8
        %s325 = scalar_lea.vmem %s6, %s324
      $region32: #{all_graph_net_forward.2} parent=15 // pred_fallthru
        _
      // Predicated region
      $region33: #{all_graph_net_forward.2} parent=15 // pred_check
        %p326 = pneg %p159
      $region34: #{all_graph_net_forward.2} parent=15 // pred_check_branch
        %328 = sbr.rel (%p326) target = $region36
      $region35: #{all_graph_net_forward.2} parent=15 // pred_region
        %p329 = scmp.lt.s32.totalorder %s31, 7
        %s330 = scalar_select %p329, %s31, 7
        %s331 = scalar_lea.vmem %s7, %s330
      $region36: #{all_graph_net_forward.2} parent=15 // pred_fallthru
        _
      // Predicated region
      $region37: #{all_graph_net_forward.2} parent=15 // pred_check
        %p332 = pneg %p185
      $region38: #{all_graph_net_forward.2} parent=15 // pred_check_branch
        %334 = sbr.rel (%p332) target = $region40
      $region39: #{all_graph_net_forward.2} parent=15 // pred_region
        %p335 = scmp.lt.s32.totalorder %s31, 7
        %s336 = scalar_select %p335, %s31, 7
        %s337 = smul.addr %s336, 16
        %s338 = smul.addr %s337, 8
        %s339 = scalar_lea.vmem %s8, %s338
      $region40: #{all_graph_net_forward.2} parent=15 // pred_fallthru
        _
      // Predicated region
      $region41: #{all_graph_net_forward.2} parent=15 // pred_check
        %p340 = pneg %p211
      $region42: #{all_graph_net_forward.2} parent=15 // pred_check_branch
        %342 = sbr.rel (%p340) target = $region44
      $region43: #{all_graph_net_forward.2} parent=15 // pred_region
        %p343 = scmp.lt.s32.totalorder %s31, 7
        %s344 = scalar_select %p343, %s31, 7
        %s345 = smul.addr %s344, 16
        %s346 = smul.addr %s345, 8
        %s347 = scalar_lea.vmem %s9, %s346
      $region44: #{all_graph_net_forward.2} parent=15 // pred_fallthru
        _
      // Predicated region
      $region45: #{all_graph_net_forward.2} parent=15 // pred_check
        %p348 = pneg %p237
      $region46: #{all_graph_net_forward.2} parent=15 // pred_check_branch
        %350 = sbr.rel (%p348) target = $region48
      $region47: #{all_graph_net_forward.2} parent=15 // pred_region
        %p351 = scmp.lt.s32.totalorder %s31, 7
        %s352 = scalar_select %p351, %s31, 7
        %s353 = scalar_lea.vmem %s10, %s352
      $region48: #{all_graph_net_forward.2} parent=15 // pred_fallthru
        _
    $region16: #{all_graph_net_forward.2} parent=5 // pred_fallthru
      _
    %p354 = scmp.le.s32.totalorder 1, %s31
    %p355 = scmp.lt.s32.totalorder %s31, 9
    %p356 = pnand %p354, %p355
    %p357 = pneg %p356
    // Predicated region
    $region49: #{all_graph_net_forward.2} parent=5 // pred_check
      _
    $region50: #{all_graph_net_forward.2} parent=5 // pred_check_branch
      %359 = sbr.rel (%p356) target = $region52
    $region51: #{all_graph_net_forward.2} parent=5 // pred_region
      %s360 = ssub.s32 %s31, 1
      %s361 = sld [smem:[#allocation3 + %s36]]
      %p362 = scmp.lt.s32.totalorder %s361, 2
      %s363 = scalar_select %p362, %s361, 2
      %s364 = smul.addr %s363, 3
      %s365 = smul.addr %s364, 8
      %s366 = scalar_lea.vmem %s3, %s365
      %p367 = pneg %p59
      %p368 = pneg %p56
      %s369 = sld [smem:[#allocation4 + %s36]]
      %p370 = scmp.lt.s32.totalorder %s369, 2
      %s371 = scalar_select %p370, %s369, 2
      %s372 = smul.addr %s371, 3
      %s373 = smul.addr %s372, 8
      %s374 = scalar_lea.vmem %s4, %s373
      %p375 = pneg %p87
      %p376 = pneg %p84
      %p377 = scmp.lt.s32.totalorder %s36, 7
      %s378 = scalar_select %p377, %s36, 7
      %s379 = smul.addr %s378, 3
      %s380 = smul.addr %s379, 8
      %s381 = scalar_lea.vmem %s5, %s380
      %p382 = pneg %p113
      %p383 = pneg %p110
      %p384 = scmp.lt.s32.totalorder %s36, 7
      %s385 = scalar_select %p384, %s36, 7
      %s386 = smul.addr %s385, 16
      %s387 = smul.addr %s386, 8
      %s388 = scalar_lea.vmem %s6, %s387
      %p389 = pneg %p139
      %p390 = pneg %p136
      %p391 = scmp.lt.s32.totalorder %s36, 7
      %s392 = scalar_select %p391, %s36, 7
      %s393 = scalar_lea.vmem %s7, %s392
      %p394 = pneg %p165
      %p395 = pneg %p162
      %p396 = scmp.lt.s32.totalorder %s36, 7
      %s397 = scalar_select %p396, %s36, 7
      %s398 = smul.addr %s397, 16
      %s399 = smul.addr %s398, 8
      %s400 = scalar_lea.vmem %s8, %s399
      %p401 = pneg %p191
      %p402 = pneg %p188
      %p403 = scmp.lt.s32.totalorder %s36, 7
      %s404 = scalar_select %p403, %s36, 7
      %s405 = smul.addr %s404, 16
      %s406 = smul.addr %s405, 8
      %s407 = scalar_lea.vmem %s9, %s406
      %p408 = pneg %p217
      %p409 = pneg %p214
      %p410 = scmp.lt.s32.totalorder %s36, 7
      %s411 = scalar_select %p410, %s36, 7
      %s412 = scalar_lea.vmem %s10, %s411
      %p413 = pneg %p243
      %p414 = pneg %p240
      %p415 = pneg %p271
      %p416 = pneg %p268
      %s417 = sld [smem:[#allocation3 + %s36]]
      %p418 = scmp.lt.s32.totalorder %s417, 2
      %s419 = scalar_select %p418, %s417, 2
      %s420 = smul.addr %s419, 3
      %s421 = smul.addr %s420, 8
      %s422 = scalar_lea.vmem %s11, %s421
      %s423 = sld [smem:[#allocation3 + %s36]]
      %p424 = scmp.lt.s32.totalorder %s423, 2
      %s425 = scalar_select %p424, %s423, 2
      %s426 = smul.addr %s425, 3
      %s427 = smul.addr %s426, 8
      %s428 = scalar_lea.vmem %s3, %s427
      %s429 = sld [smem:[#allocation3 + %s36]]
      %s430 = sld [smem:[#allocation4 + %s36]]
      %p431 = scmp.lt.s32.totalorder %s430, 2
      %s432 = scalar_select %p431, %s430, 2
      %s433 = smul.addr %s432, 3
      %s434 = smul.addr %s433, 8
      %s435 = scalar_lea.vmem %s4, %s434
      %s436 = sld [smem:[#allocation4 + %s36]]
      %p437 = scmp.lt.s32.totalorder %s36, 7
      %s438 = scalar_select %p437, %s36, 7
      %s439 = smul.addr %s438, 3
      %s440 = smul.addr %s439, 8
      %s441 = scalar_lea.vmem %s5, %s440
      %p442 = scmp.lt.s32.totalorder %s36, 7
      %s443 = scalar_select %p442, %s36, 7
      %s444 = smul.addr %s443, 16
      %s445 = smul.addr %s444, 8
      %s446 = scalar_lea.vmem %s6, %s445
      %p447 = scmp.lt.s32.totalorder %s36, 7
      %s448 = scalar_select %p447, %s36, 7
      %s449 = scalar_lea.vmem %s7, %s448
      %p450 = scmp.lt.s32.totalorder %s36, 7
      %s451 = scalar_select %p450, %s36, 7
      %s452 = smul.addr %s451, 16
      %s453 = smul.addr %s452, 8
      %s454 = scalar_lea.vmem %s8, %s453
      %p455 = scmp.lt.s32.totalorder %s36, 7
      %s456 = scalar_select %p455, %s36, 7
      %s457 = smul.addr %s456, 16
      %s458 = smul.addr %s457, 8
      %s459 = scalar_lea.vmem %s9, %s458
      %p460 = scmp.lt.s32.totalorder %s36, 7
      %s461 = scalar_select %p460, %s36, 7
      %s462 = scalar_lea.vmem %s10, %s461
      %s463 = sld [smem:[#allocation3 + %s36]]
      %p464 = scmp.lt.s32.totalorder %s463, 2
      %s465 = scalar_select %p464, %s463, 2
      %s466 = smul.addr %s465, 3
      %s467 = smul.addr %s466, 8
      %s468 = scalar_lea.vmem %s11, %s467
      %s469 = sld [smem:[#allocation3 + %s36]]
      %s471 = sld [smem:[#allocation5 + %s36]]
      %p472 = scmp.eq.s32.totalorder %s471, 1
      // Predicated region
      $region53: #{all_graph_net_forward.2} parent=51 // pred_check
        %p473 = pneg %p472
      $region54: #{all_graph_net_forward.2} parent=51 // pred_check_branch
        %475 = sbr.rel (%p473) target = $region56
      $region55: #{all_graph_net_forward.2} parent=51 // pred_region
        %476 = vst [vmem:[%s468] sm:$0xff] 0.0
        %477 = vst [vmem:[%s468 + $0x8] sm:$0xff] 0.0
        %478 = vst [vmem:[%s468 + $0x10] sm:$0xff] 0.0
      $region56: #{all_graph_net_forward.2} parent=51 // pred_fallthru
        _
      %v479 = vld [vmem:[%s435] sm:$0xff]
      %v480 = vld [vmem:[%s435 + $0x8] sm:$0xff]
      %v481 = vld [vmem:[%s435 + $0x10] sm:$0xff]
      %v482 = vpack.c.bf16 %v480, %v479
      %v483 = vpack.c.bf16 %v481, %v481
      %v484 = vld [vmem:[%s446] sm:$0xff]
      %v485 = vld [vmem:[%s446 + $0x8] sm:$0xff]
      %v486 = vld [vmem:[%s446 + $0x10] sm:$0xff]
      %v487 = vld [vmem:[%s446 + $0x18] sm:$0xff]
      %v488 = vld [vmem:[%s446 + $0x20] sm:$0xff]
      %v489 = vld [vmem:[%s446 + $0x28] sm:$0xff]
      %v490 = vld [vmem:[%s446 + $0x30] sm:$0xff]
      %v491 = vld [vmem:[%s446 + $0x38] sm:$0xff]
      %v492 = vld [vmem:[%s446 + $0x40] sm:$0xff]
      %v493 = vld [vmem:[%s446 + $0x48] sm:$0xff]
      %v494 = vld [vmem:[%s446 + $0x50] sm:$0xff]
      %v495 = vld [vmem:[%s446 + $0x58] sm:$0xff]
      %v496 = vld [vmem:[%s446 + $0x60] sm:$0xff]
      %v497 = vld [vmem:[%s446 + $0x68] sm:$0xff]
      %v498 = vld [vmem:[%s446 + $0x70] sm:$0xff]
      %v499 = vld [vmem:[%s446 + $0x78] sm:$0xff]
      %v500 = vpack.c.bf16 %v485, %v484
      %v501 = vpack.c.bf16 %v487, %v486
      %v502 = vpack.c.bf16 %v489, %v488
      %v503 = vpack.c.bf16 %v491, %v490
      %v504 = vpack.c.bf16 %v493, %v492
      %v505 = vpack.c.bf16 %v495, %v494
      %v506 = vpack.c.bf16 %v497, %v496
      %v507 = vpack.c.bf16 %v499, %v498
      %v508 = vld [vmem:[%s449] sm:$0x1]
      %v510 = vlaneseq
      %v511 = vshrl.u32 %v510, 7
      %v512 = vsub.s32 0, %v511
      %v513 = vrot.slane %v508, %v512
      %515 = vmatprep.subr.bf16.mxu0 0
      %516 = vmatpush1.bf16.msra.mxu0 %v500
      %517 = vmatprep.subr.bf16.mxu0 0
      %518 = vmatpush1.bf16.msra.mxu0 %v501
      %519 = vmatprep.subr.bf16.mxu0 0
      %520 = vmatpush1.bf16.msra.mxu0 %v502
      %521 = vmatprep.subr.bf16.mxu0 0
      %522 = vmatpush1.bf16.msra.mxu0 %v503
      %523 = vmatprep.subr.bf16.mxu0 0
      %524 = vmatpush1.bf16.msra.mxu0 %v504
      %525 = vmatprep.subr.bf16.mxu0 0
      %526 = vmatpush1.bf16.msra.mxu0 %v505
      %527 = vmatprep.subr.bf16.mxu0 0
      %528 = vmatpush1.bf16.msra.mxu0 %v506
      %529 = vmatprep.subr.bf16.mxu0 0
      %530 = vmatpush1.bf16.msra.mxu0 %v507
      %531 = vmatprep.subr.bf16.mxu0 0
      %532 = vmatpush1.bf16.msra.mxu0 0
      %533 = vmatprep.subr.bf16.mxu0 0
      %534 = vmatpush1.bf16.msra.mxu0 0
      %535 = vmatprep.subr.bf16.mxu0 0
      %536 = vmatpush1.bf16.msra.mxu0 0
      %537 = vmatprep.subr.bf16.mxu0 0
      %538 = vmatpush1.bf16.msra.mxu0 0
      %539 = vmatprep.subr.bf16.mxu0 0
      %540 = vmatpush1.bf16.msra.mxu0 0
      %541 = vmatprep.subr.bf16.mxu0 0
      %542 = vmatpush1.bf16.msra.mxu0 0
      %543 = vmatprep.subr.bf16.mxu0 0
      %544 = vmatpush1.bf16.msra.mxu0 0
      %545 = vmatprep.subr.bf16.mxu0 0
      %546 = vmatpush1.bf16.msra.mxu0 0
      %547 = vmatprep.mubr.bf16.mxu0 0
      %548 = vmatmul.mubr.bf16.gmra.mrb[0].mxu0 %v482
      %v549 = vpop.f32.mrb[0].mxu0
      %v550 = vadd.f32 %v513, %v549
      %v551 = vpop.f32.mrb[0].mxu0
      %v552 = vpop.f32.mrb[0].mxu0
      %v553 = vadd.f32 %v513, %v552
      %v554 = vpop.f32.mrb[0].mxu0
      %555 = vmatprep.mubr.bf16.mxu0 0
      %556 = vmatmul.mubr.bf16.gmra.mrb[0].mxu0 %v483
      %v557 = vpop.f32.mrb[0].mxu0
      %v558 = vadd.f32 %v513, %v557
      %v559 = vpop.f32.mrb[0].mxu0
      %v560 = vpop.f32.mrb[0].mxu0
      %v561 = vpop.f32.mrb[0].mxu0
      %562 = vdwg.mxu0
      %v563 = vmax.f32 %v550, 0.0
      %v564 = vmax.f32 %v553, 0.0
      %v565 = vmax.f32 %v558, 0.0
      %v566 = vld [vmem:[%s441] sm:$0xff]
      %v567 = vld [vmem:[%s441 + $0x8] sm:$0xff]
      %v568 = vld [vmem:[%s441 + $0x10] sm:$0xff]
      %570 = vset.pattern.permute.xlu0 0
      %571 = vperm.xlu0 %570, %v566
      %v572 = vpop.permute.xlu0 %571
      %575 = vset.pattern.permute.xlu0 0
      %576 = vperm.xlu0 %575, %v567
      %v577 = vpop.permute.xlu0 %576
      %580 = vset.pattern.permute.xlu0 0
      %581 = vperm.xlu0 %580, %v568
      %v582 = vpop.permute.xlu0 %581
      %v584 = vlaneseq
      %v585 = vshrl.u32 %v584, 7
      %v586 = vsub.s32 0, %v585
      %v587 = vrot.slane %v563, %v586
      %v588 = vmul.f32 %v572, %v587
      %v589 = vmul.f32 %v577, %v587
      %v590 = vmul.f32 %v582, %v587
      %v591 = vmax.f32 %v588, 0.0
      %v592 = vmax.f32 %v589, 0.0
      %v593 = vmax.f32 %v590, 0.0
      %594 = vset.pattern.permute.xlu0 1
      %595 = vperm.xlu0 %594, %v566
      %v596 = vpop.permute.xlu0 %595
      %598 = vset.pattern.permute.xlu0 1
      %599 = vperm.xlu0 %598, %v567
      %v600 = vpop.permute.xlu0 %599
      %602 = vset.pattern.permute.xlu0 1
      %603 = vperm.xlu0 %602, %v568
      %v604 = vpop.permute.xlu0 %603
      %v606 = vlaneseq
      %v607 = vshrl.u32 %v606, 7
      %v608 = vsub.s32 1, %v607
      %v609 = vrot.slane %v563, %v608
      %v610 = vmul.f32 %v596, %v609
      %v611 = vmul.f32 %v600, %v609
      %v612 = vmul.f32 %v604, %v609
      %v613 = vmax.f32 %v591, %v610
      %v614 = vmax.f32 %v592, %v611
      %v615 = vmax.f32 %v593, %v612
      %616 = vset.pattern.permute.xlu0 2
      %617 = vperm.xlu0 %616, %v566
      %v618 = vpop.permute.xlu0 %617
      %620 = vset.pattern.permute.xlu0 2
      %621 = vperm.xlu0 %620, %v567
      %v622 = vpop.permute.xlu0 %621
      %624 = vset.pattern.permute.xlu0 2
      %625 = vperm.xlu0 %624, %v568
      %v626 = vpop.permute.xlu0 %625
      %v628 = vlaneseq
      %v629 = vshrl.u32 %v628, 7
      %v630 = vsub.s32 2, %v629
      %v631 = vrot.slane %v563, %v630
      %v632 = vmul.f32 %v618, %v631
      %v633 = vmul.f32 %v622, %v631
      %v634 = vmul.f32 %v626, %v631
      %v635 = vmax.f32 %v613, %v632
      %v636 = vmax.f32 %v614, %v633
      %v637 = vmax.f32 %v615, %v634
      %638 = vset.pattern.permute.xlu0 3
      %639 = vperm.xlu0 %638, %v566
      %v640 = vpop.permute.xlu0 %639
      %642 = vset.pattern.permute.xlu0 3
      %643 = vperm.xlu0 %642, %v567
      %v644 = vpop.permute.xlu0 %643
      %646 = vset.pattern.permute.xlu0 3
      %647 = vperm.xlu0 %646, %v568
      %v648 = vpop.permute.xlu0 %647
      %v650 = vlaneseq
      %v651 = vshrl.u32 %v650, 7
      %v652 = vsub.s32 3, %v651
      %v653 = vrot.slane %v563, %v652
      %v654 = vmul.f32 %v640, %v653
      %v655 = vmul.f32 %v644, %v653
      %v656 = vmul.f32 %v648, %v653
      %v657 = vmax.f32 %v635, %v654
      %v658 = vmax.f32 %v636, %v655
      %v659 = vmax.f32 %v637, %v656
      %660 = vset.pattern.permute.xlu0 4
      %661 = vperm.xlu0 %660, %v566
      %v662 = vpop.permute.xlu0 %661
      %664 = vset.pattern.permute.xlu0 4
      %665 = vperm.xlu0 %664, %v567
      %v666 = vpop.permute.xlu0 %665
      %668 = vset.pattern.permute.xlu0 4
      %669 = vperm.xlu0 %668, %v568
      %v670 = vpop.permute.xlu0 %669
      %v672 = vlaneseq
      %v673 = vshrl.u32 %v672, 7
      %v674 = vsub.s32 4, %v673
      %v675 = vrot.slane %v563, %v674
      %v676 = vmul.f32 %v662, %v675
      %v677 = vmul.f32 %v666, %v675
      %v678 = vmul.f32 %v670, %v675
      %v679 = vmax.f32 %v657, %v676
      %v680 = vmax.f32 %v658, %v677
      %v681 = vmax.f32 %v659, %v678
      %682 = vset.pattern.permute.xlu0 5
      %683 = vperm.xlu0 %682, %v566
      %v684 = vpop.permute.xlu0 %683
      %686 = vset.pattern.permute.xlu0 5
      %687 = vperm.xlu0 %686, %v567
      %v688 = vpop.permute.xlu0 %687
      %690 = vset.pattern.permute.xlu0 5
      %691 = vperm.xlu0 %690, %v568
      %v692 = vpop.permute.xlu0 %691
      %v694 = vlaneseq
      %v695 = vshrl.u32 %v694, 7
      %v696 = vsub.s32 5, %v695
      %v697 = vrot.slane %v563, %v696
      %v698 = vmul.f32 %v684, %v697
      %v699 = vmul.f32 %v688, %v697
      %v700 = vmul.f32 %v692, %v697
      %v701 = vmax.f32 %v679, %v698
      %v702 = vmax.f32 %v680, %v699
      %v703 = vmax.f32 %v681, %v700
      %704 = vset.pattern.permute.xlu0 6
      %705 = vperm.xlu0 %704, %v566
      %v706 = vpop.permute.xlu0 %705
      %708 = vset.pattern.permute.xlu0 6
      %709 = vperm.xlu0 %708, %v567
      %v710 = vpop.permute.xlu0 %709
      %712 = vset.pattern.permute.xlu0 6
      %713 = vperm.xlu0 %712, %v568
      %v714 = vpop.permute.xlu0 %713
      %v716 = vlaneseq
      %v717 = vshrl.u32 %v716, 7
      %v718 = vsub.s32 6, %v717
      %v719 = vrot.slane %v563, %v718
      %v720 = vmul.f32 %v706, %v719
      %v721 = vmul.f32 %v710, %v719
      %v722 = vmul.f32 %v714, %v719
      %v723 = vmax.f32 %v701, %v720
      %v724 = vmax.f32 %v702, %v721
      %v725 = vmax.f32 %v703, %v722
      %726 = vset.pattern.permute.xlu0 7
      %727 = vperm.xlu0 %726, %v566
      %v728 = vpop.permute.xlu0 %727
      %730 = vset.pattern.permute.xlu0 7
      %731 = vperm.xlu0 %730, %v567
      %v732 = vpop.permute.xlu0 %731
      %734 = vset.pattern.permute.xlu0 7
      %735 = vperm.xlu0 %734, %v568
      %v736 = vpop.permute.xlu0 %735
      %v738 = vlaneseq
      %v739 = vshrl.u32 %v738, 7
      %v740 = vsub.s32 7, %v739
      %v741 = vrot.slane %v563, %v740
      %v742 = vmul.f32 %v728, %v741
      %v743 = vmul.f32 %v732, %v741
      %v744 = vmul.f32 %v736, %v741
      %v745 = vmax.f32 %v723, %v742
      %v746 = vmax.f32 %v724, %v743
      %v747 = vmax.f32 %v725, %v744
      %748 = vset.pattern.permute.xlu0 8
      %749 = vperm.xlu0 %748, %v566
      %v750 = vpop.permute.xlu0 %749
      %752 = vset.pattern.permute.xlu0 8
      %753 = vperm.xlu0 %752, %v567
      %v754 = vpop.permute.xlu0 %753
      %756 = vset.pattern.permute.xlu0 8
      %757 = vperm.xlu0 %756, %v568
      %v758 = vpop.permute.xlu0 %757
      %v760 = vlaneseq
      %v761 = vshrl.u32 %v760, 7
      %v762 = vsub.s32 0, %v761
      %v763 = vrot.slane %v564, %v762
      %v764 = vmul.f32 %v750, %v763
      %v765 = vmul.f32 %v754, %v763
      %v766 = vmul.f32 %v758, %v763
      %v767 = vmax.f32 %v745, %v764
      %v768 = vmax.f32 %v746, %v765
      %v769 = vmax.f32 %v747, %v766
      %770 = vset.pattern.permute.xlu0 9
      %771 = vperm.xlu0 %770, %v566
      %v772 = vpop.permute.xlu0 %771
      %774 = vset.pattern.permute.xlu0 9
      %775 = vperm.xlu0 %774, %v567
      %v776 = vpop.permute.xlu0 %775
      %778 = vset.pattern.permute.xlu0 9
      %779 = vperm.xlu0 %778, %v568
      %v780 = vpop.permute.xlu0 %779
      %v782 = vlaneseq
      %v783 = vshrl.u32 %v782, 7
      %v784 = vsub.s32 1, %v783
      %v785 = vrot.slane %v564, %v784
      %v786 = vmul.f32 %v772, %v785
      %v787 = vmul.f32 %v776, %v785
      %v788 = vmul.f32 %v780, %v785
      %v789 = vmax.f32 %v767, %v786
      %v790 = vmax.f32 %v768, %v787
      %v791 = vmax.f32 %v769, %v788
      %792 = vset.pattern.permute.xlu0 10
      %793 = vperm.xlu0 %792, %v566
      %v794 = vpop.permute.xlu0 %793
      %796 = vset.pattern.permute.xlu0 10
      %797 = vperm.xlu0 %796, %v567
      %v798 = vpop.permute.xlu0 %797
      %800 = vset.pattern.permute.xlu0 10
      %801 = vperm.xlu0 %800, %v568
      %v802 = vpop.permute.xlu0 %801
      %v804 = vlaneseq
      %v805 = vshrl.u32 %v804, 7
      %v806 = vsub.s32 2, %v805
      %v807 = vrot.slane %v564, %v806
      %v808 = vmul.f32 %v794, %v807
      %v809 = vmul.f32 %v798, %v807
      %v810 = vmul.f32 %v802, %v807
      %v811 = vmax.f32 %v789, %v808
      %v812 = vmax.f32 %v790, %v809
      %v813 = vmax.f32 %v791, %v810
      %814 = vset.pattern.permute.xlu0 11
      %815 = vperm.xlu0 %814, %v566
      %v816 = vpop.permute.xlu0 %815
      %818 = vset.pattern.permute.xlu0 11
      %819 = vperm.xlu0 %818, %v567
      %v820 = vpop.permute.xlu0 %819
      %822 = vset.pattern.permute.xlu0 11
      %823 = vperm.xlu0 %822, %v568
      %v824 = vpop.permute.xlu0 %823
      %v826 = vlaneseq
      %v827 = vshrl.u32 %v826, 7
      %v828 = vsub.s32 3, %v827
      %v829 = vrot.slane %v564, %v828
      %v830 = vmul.f32 %v816, %v829
      %v831 = vmul.f32 %v820, %v829
      %v832 = vmul.f32 %v824, %v829
      %v833 = vmax.f32 %v811, %v830
      %v834 = vmax.f32 %v812, %v831
      %v835 = vmax.f32 %v813, %v832
      %836 = vset.pattern.permute.xlu0 12
      %837 = vperm.xlu0 %836, %v566
      %v838 = vpop.permute.xlu0 %837
      %840 = vset.pattern.permute.xlu0 12
      %841 = vperm.xlu0 %840, %v567
      %v842 = vpop.permute.xlu0 %841
      %844 = vset.pattern.permute.xlu0 12
      %845 = vperm.xlu0 %844, %v568
      %v846 = vpop.permute.xlu0 %845
      %v848 = vlaneseq
      %v849 = vshrl.u32 %v848, 7
      %v850 = vsub.s32 4, %v849
      %v851 = vrot.slane %v564, %v850
      %v852 = vmul.f32 %v838, %v851
      %v853 = vmul.f32 %v842, %v851
      %v854 = vmul.f32 %v846, %v851
      %v855 = vmax.f32 %v833, %v852
      %v856 = vmax.f32 %v834, %v853
      %v857 = vmax.f32 %v835, %v854
      %858 = vset.pattern.permute.xlu0 13
      %859 = vperm.xlu0 %858, %v566
      %v860 = vpop.permute.xlu0 %859
      %862 = vset.pattern.permute.xlu0 13
      %863 = vperm.xlu0 %862, %v567
      %v864 = vpop.permute.xlu0 %863
      %866 = vset.pattern.permute.xlu0 13
      %867 = vperm.xlu0 %866, %v568
      %v868 = vpop.permute.xlu0 %867
      %v870 = vlaneseq
      %v871 = vshrl.u32 %v870, 7
      %v872 = vsub.s32 5, %v871
      %v873 = vrot.slane %v564, %v872
      %v874 = vmul.f32 %v860, %v873
      %v875 = vmul.f32 %v864, %v873
      %v876 = vmul.f32 %v868, %v873
      %v877 = vmax.f32 %v855, %v874
      %v878 = vmax.f32 %v856, %v875
      %v879 = vmax.f32 %v857, %v876
      %880 = vset.pattern.permute.xlu0 14
      %881 = vperm.xlu0 %880, %v566
      %v882 = vpop.permute.xlu0 %881
      %884 = vset.pattern.permute.xlu0 14
      %885 = vperm.xlu0 %884, %v567
      %v886 = vpop.permute.xlu0 %885
      %888 = vset.pattern.permute.xlu0 14
      %889 = vperm.xlu0 %888, %v568
      %v890 = vpop.permute.xlu0 %889
      %v892 = vlaneseq
      %v893 = vshrl.u32 %v892, 7
      %v894 = vsub.s32 6, %v893
      %v895 = vrot.slane %v564, %v894
      %v896 = vmul.f32 %v882, %v895
      %v897 = vmul.f32 %v886, %v895
      %v898 = vmul.f32 %v890, %v895
      %v899 = vmax.f32 %v877, %v896
      %v900 = vmax.f32 %v878, %v897
      %v901 = vmax.f32 %v879, %v898
      %902 = vset.pattern.permute.xlu0 15
      %903 = vperm.xlu0 %902, %v566
      %v904 = vpop.permute.xlu0 %903
      %906 = vset.pattern.permute.xlu0 15
      %907 = vperm.xlu0 %906, %v567
      %v908 = vpop.permute.xlu0 %907
      %910 = vset.pattern.permute.xlu0 15
      %911 = vperm.xlu0 %910, %v568
      %v912 = vpop.permute.xlu0 %911
      %v914 = vlaneseq
      %v915 = vshrl.u32 %v914, 7
      %v916 = vsub.s32 7, %v915
      %v917 = vrot.slane %v564, %v916
      %v918 = vmul.f32 %v904, %v917
      %v919 = vmul.f32 %v908, %v917
      %v920 = vmul.f32 %v912, %v917
      %v921 = vmax.f32 %v899, %v918
      %v922 = vmax.f32 %v900, %v919
      %v923 = vmax.f32 %v901, %v920
      %924 = vset.pattern.permute.xlu0 16
      %925 = vperm.xlu0 %924, %v566
      %v926 = vpop.permute.xlu0 %925
      %928 = vset.pattern.permute.xlu0 16
      %929 = vperm.xlu0 %928, %v567
      %v930 = vpop.permute.xlu0 %929
      %932 = vset.pattern.permute.xlu0 16
      %933 = vperm.xlu0 %932, %v568
      %v934 = vpop.permute.xlu0 %933
      %v936 = vlaneseq
      %v937 = vshrl.u32 %v936, 7
      %v938 = vsub.s32 0, %v937
      %v939 = vrot.slane %v565, %v938
      %v940 = vmul.f32 %v926, %v939
      %v941 = vmul.f32 %v930, %v939
      %v942 = vmul.f32 %v934, %v939
      %v943 = vmax.f32 %v921, %v940
      %v944 = vmax.f32 %v922, %v941
      %v945 = vmax.f32 %v923, %v942
      %946 = vset.pattern.permute.xlu0 17
      %947 = vperm.xlu0 %946, %v566
      %v948 = vpop.permute.xlu0 %947
      %950 = vset.pattern.permute.xlu0 17
      %951 = vperm.xlu0 %950, %v567
      %v952 = vpop.permute.xlu0 %951
      %954 = vset.pattern.permute.xlu0 17
      %955 = vperm.xlu0 %954, %v568
      %v956 = vpop.permute.xlu0 %955
      %v958 = vlaneseq
      %v959 = vshrl.u32 %v958, 7
      %v960 = vsub.s32 1, %v959
      %v961 = vrot.slane %v565, %v960
      %v962 = vmul.f32 %v948, %v961
      %v963 = vmul.f32 %v952, %v961
      %v964 = vmul.f32 %v956, %v961
      %v965 = vmax.f32 %v943, %v962
      %v966 = vmax.f32 %v944, %v963
      %v967 = vmax.f32 %v945, %v964
      %968 = vset.pattern.permute.xlu0 18
      %969 = vperm.xlu0 %968, %v566
      %v970 = vpop.permute.xlu0 %969
      %972 = vset.pattern.permute.xlu0 18
      %973 = vperm.xlu0 %972, %v567
      %v974 = vpop.permute.xlu0 %973
      %976 = vset.pattern.permute.xlu0 18
      %977 = vperm.xlu0 %976, %v568
      %v978 = vpop.permute.xlu0 %977
      %v980 = vlaneseq
      %v981 = vshrl.u32 %v980, 7
      %v982 = vsub.s32 2, %v981
      %v983 = vrot.slane %v565, %v982
      %v984 = vmul.f32 %v970, %v983
      %v985 = vmul.f32 %v974, %v983
      %v986 = vmul.f32 %v978, %v983
      %v987 = vmax.f32 %v965, %v984
      %v988 = vmax.f32 %v966, %v985
      %v989 = vmax.f32 %v967, %v986
      %990 = vset.pattern.permute.xlu0 19
      %991 = vperm.xlu0 %990, %v566
      %v992 = vpop.permute.xlu0 %991
      %994 = vset.pattern.permute.xlu0 19
      %995 = vperm.xlu0 %994, %v567
      %v996 = vpop.permute.xlu0 %995
      %998 = vset.pattern.permute.xlu0 19
      %999 = vperm.xlu0 %998, %v568
      %v1000 = vpop.permute.xlu0 %999
      %v1002 = vlaneseq
      %v1003 = vshrl.u32 %v1002, 7
      %v1004 = vsub.s32 3, %v1003
      %v1005 = vrot.slane %v565, %v1004
      %v1006 = vmul.f32 %v992, %v1005
      %v1007 = vmul.f32 %v996, %v1005
      %v1008 = vmul.f32 %v1000, %v1005
      %v1009 = vmax.f32 %v987, %v1006
      %v1010 = vmax.f32 %v988, %v1007
      %v1011 = vmax.f32 %v989, %v1008
      %1012 = vset.pattern.permute.xlu0 20
      %1013 = vperm.xlu0 %1012, %v566
      %v1014 = vpop.permute.xlu0 %1013
      %1016 = vset.pattern.permute.xlu0 20
      %1017 = vperm.xlu0 %1016, %v567
      %v1018 = vpop.permute.xlu0 %1017
      %1020 = vset.pattern.permute.xlu0 20
      %1021 = vperm.xlu0 %1020, %v568
      %v1022 = vpop.permute.xlu0 %1021
      %v1024 = vlaneseq
      %v1025 = vshrl.u32 %v1024, 7
      %v1026 = vsub.s32 4, %v1025
      %v1027 = vrot.slane %v565, %v1026
      %v1028 = vmul.f32 %v1014, %v1027
      %v1029 = vmul.f32 %v1018, %v1027
      %v1030 = vmul.f32 %v1022, %v1027
      %v1031 = vmax.f32 %v1009, %v1028
      %v1032 = vmax.f32 %v1010, %v1029
      %v1033 = vmax.f32 %v1011, %v1030
      %1034 = vset.pattern.permute.xlu0 21
      %1035 = vperm.xlu0 %1034, %v566
      %v1036 = vpop.permute.xlu0 %1035
      %1038 = vset.pattern.permute.xlu0 21
      %1039 = vperm.xlu0 %1038, %v567
      %v1040 = vpop.permute.xlu0 %1039
      %1042 = vset.pattern.permute.xlu0 21
      %1043 = vperm.xlu0 %1042, %v568
      %v1044 = vpop.permute.xlu0 %1043
      %v1046 = vlaneseq
      %v1047 = vshrl.u32 %v1046, 7
      %v1048 = vsub.s32 5, %v1047
      %v1049 = vrot.slane %v565, %v1048
      %v1050 = vmul.f32 %v1036, %v1049
      %v1051 = vmul.f32 %v1040, %v1049
      %v1052 = vmul.f32 %v1044, %v1049
      %v1053 = vmax.f32 %v1031, %v1050
      %v1054 = vmax.f32 %v1032, %v1051
      %v1055 = vmax.f32 %v1033, %v1052
      %1056 = vset.pattern.permute.xlu0 22
      %1057 = vperm.xlu0 %1056, %v566
      %v1058 = vpop.permute.xlu0 %1057
      %1060 = vset.pattern.permute.xlu0 22
      %1061 = vperm.xlu0 %1060, %v567
      %v1062 = vpop.permute.xlu0 %1061
      %1064 = vset.pattern.permute.xlu0 22
      %1065 = vperm.xlu0 %1064, %v568
      %v1066 = vpop.permute.xlu0 %1065
      %v1068 = vlaneseq
      %v1069 = vshrl.u32 %v1068, 7
      %v1070 = vsub.s32 6, %v1069
      %v1071 = vrot.slane %v565, %v1070
      %v1072 = vmul.f32 %v1058, %v1071
      %v1073 = vmul.f32 %v1062, %v1071
      %v1074 = vmul.f32 %v1066, %v1071
      %v1075 = vmax.f32 %v1053, %v1072
      %v1076 = vmax.f32 %v1054, %v1073
      %v1077 = vmax.f32 %v1055, %v1074
      %1078 = vset.pattern.permute.xlu0 23
      %1079 = vperm.xlu0 %1078, %v566
      %v1080 = vpop.permute.xlu0 %1079
      %1082 = vset.pattern.permute.xlu0 23
      %1083 = vperm.xlu0 %1082, %v567
      %v1084 = vpop.permute.xlu0 %1083
      %1086 = vset.pattern.permute.xlu0 23
      %1087 = vperm.xlu0 %1086, %v568
      %v1088 = vpop.permute.xlu0 %1087
      %v1090 = vlaneseq
      %v1091 = vshrl.u32 %v1090, 7
      %v1092 = vsub.s32 7, %v1091
      %v1093 = vrot.slane %v565, %v1092
      %v1094 = vmul.f32 %v1080, %v1093
      %v1095 = vmul.f32 %v1084, %v1093
      %v1096 = vmul.f32 %v1088, %v1093
      %v1097 = vmax.f32 %v1075, %v1094
      %v1098 = vmax.f32 %v1076, %v1095
      %v1099 = vmax.f32 %v1077, %v1096
      %v1100 = vld [vmem:[%s428] sm:$0xff]
      %v1101 = vld [vmem:[%s428 + $0x8] sm:$0xff]
      %v1102 = vld [vmem:[%s428 + $0x10] sm:$0xff]
      %v1103 = vpack.c.bf16 %v1101, %v1100
      %v1104 = vpack.c.bf16 %v1102, %v1102
      %v1105 = vld [vmem:[%s454] sm:$0xff]
      %v1106 = vld [vmem:[%s454 + $0x8] sm:$0xff]
      %v1107 = vld [vmem:[%s454 + $0x10] sm:$0xff]
      %v1108 = vld [vmem:[%s454 + $0x18] sm:$0xff]
      %v1109 = vld [vmem:[%s454 + $0x20] sm:$0xff]
      %v1110 = vld [vmem:[%s454 + $0x28] sm:$0xff]
      %v1111 = vld [vmem:[%s454 + $0x30] sm:$0xff]
      %v1112 = vld [vmem:[%s454 + $0x38] sm:$0xff]
      %v1113 = vld [vmem:[%s454 + $0x40] sm:$0xff]
      %v1114 = vld [vmem:[%s454 + $0x48] sm:$0xff]
      %v1115 = vld [vmem:[%s454 + $0x50] sm:$0xff]
      %v1116 = vld [vmem:[%s454 + $0x58] sm:$0xff]
      %v1117 = vld [vmem:[%s454 + $0x60] sm:$0xff]
      %v1118 = vld [vmem:[%s454 + $0x68] sm:$0xff]
      %v1119 = vld [vmem:[%s454 + $0x70] sm:$0xff]
      %v1120 = vld [vmem:[%s454 + $0x78] sm:$0xff]
      %v1121 = vpack.c.bf16 %v1106, %v1105
      %v1122 = vpack.c.bf16 %v1108, %v1107
      %v1123 = vpack.c.bf16 %v1110, %v1109
      %v1124 = vpack.c.bf16 %v1112, %v1111
      %v1125 = vpack.c.bf16 %v1114, %v1113
      %v1126 = vpack.c.bf16 %v1116, %v1115
      %v1127 = vpack.c.bf16 %v1118, %v1117
      %v1128 = vpack.c.bf16 %v1120, %v1119
      %v1129 = vpack.c.bf16 %v1098, %v1097
      %v1130 = vpack.c.bf16 %v1099, %v1099
      %v1131 = vld [vmem:[%s459] sm:$0xff]
      %v1132 = vld [vmem:[%s459 + $0x8] sm:$0xff]
      %v1133 = vld [vmem:[%s459 + $0x10] sm:$0xff]
      %v1134 = vld [vmem:[%s459 + $0x18] sm:$0xff]
      %v1135 = vld [vmem:[%s459 + $0x20] sm:$0xff]
      %v1136 = vld [vmem:[%s459 + $0x28] sm:$0xff]
      %v1137 = vld [vmem:[%s459 + $0x30] sm:$0xff]
      %v1138 = vld [vmem:[%s459 + $0x38] sm:$0xff]
      %v1139 = vld [vmem:[%s459 + $0x40] sm:$0xff]
      %v1140 = vld [vmem:[%s459 + $0x48] sm:$0xff]
      %v1141 = vld [vmem:[%s459 + $0x50] sm:$0xff]
      %v1142 = vld [vmem:[%s459 + $0x58] sm:$0xff]
      %v1143 = vld [vmem:[%s459 + $0x60] sm:$0xff]
      %v1144 = vld [vmem:[%s459 + $0x68] sm:$0xff]
      %v1145 = vld [vmem:[%s459 + $0x70] sm:$0xff]
      %v1146 = vld [vmem:[%s459 + $0x78] sm:$0xff]
      %v1147 = vpack.c.bf16 %v1132, %v1131
      %v1148 = vpack.c.bf16 %v1134, %v1133
      %v1149 = vpack.c.bf16 %v1136, %v1135
      %v1150 = vpack.c.bf16 %v1138, %v1137
      %v1151 = vpack.c.bf16 %v1140, %v1139
      %v1152 = vpack.c.bf16 %v1142, %v1141
      %v1153 = vpack.c.bf16 %v1144, %v1143
      %v1154 = vpack.c.bf16 %v1146, %v1145
      %1155 = vmatprep.subr.bf16.mxu0 0
      %1156 = vmatpush1.bf16.msra.mxu0 %v1147
      %1157 = vmatprep.subr.bf16.mxu0 0
      %1158 = vmatpush1.bf16.msra.mxu0 %v1148
      %1159 = vmatprep.subr.bf16.mxu0 0
      %1160 = vmatpush1.bf16.msra.mxu0 %v1149
      %1161 = vmatprep.subr.bf16.mxu0 0
      %1162 = vmatpush1.bf16.msra.mxu0 %v1150
      %1163 = vmatprep.subr.bf16.mxu0 0
      %1164 = vmatpush1.bf16.msra.mxu0 %v1151
      %1165 = vmatprep.subr.bf16.mxu0 0
      %1166 = vmatpush1.bf16.msra.mxu0 %v1152
      %1167 = vmatprep.subr.bf16.mxu0 0
      %1168 = vmatpush1.bf16.msra.mxu0 %v1153
      %1169 = vmatprep.subr.bf16.mxu0 0
      %1170 = vmatpush1.bf16.msra.mxu0 %v1154
      %1171 = vmatprep.subr.bf16.mxu0 0
      %1172 = vmatpush1.bf16.msra.mxu0 0
      %1173 = vmatprep.subr.bf16.mxu0 0
      %1174 = vmatpush1.bf16.msra.mxu0 0
      %1175 = vmatprep.subr.bf16.mxu0 0
      %1176 = vmatpush1.bf16.msra.mxu0 0
      %1177 = vmatprep.subr.bf16.mxu0 0
      %1178 = vmatpush1.bf16.msra.mxu0 0
      %1179 = vmatprep.subr.bf16.mxu0 0
      %1180 = vmatpush1.bf16.msra.mxu0 0
      %1181 = vmatprep.subr.bf16.mxu0 0
      %1182 = vmatpush1.bf16.msra.mxu0 0
      %1183 = vmatprep.subr.bf16.mxu0 0
      %1184 = vmatpush1.bf16.msra.mxu0 0
      %1185 = vmatprep.subr.bf16.mxu0 0
      %1186 = vmatpush1.bf16.msra.mxu0 0
      %1187 = vmatprep.mubr.bf16.mxu0 0
      %1188 = vmatmul.mubr.bf16.gmra.mrb[0].mxu0 %v1129
      %v1189 = vpop.f32.mrb[0].mxu0
      %v1190 = vadd.f32 0.0, %v1189
      %v1191 = vpop.f32.mrb[0].mxu0
      %v1192 = vpop.f32.mrb[0].mxu0
      %v1193 = vadd.f32 0.0, %v1192
      %v1194 = vpop.f32.mrb[0].mxu0
      %1195 = vmatprep.mubr.bf16.mxu0 0
      %1196 = vmatmul.mubr.bf16.gmra.mrb[0].mxu0 %v1130
      %v1197 = vpop.f32.mrb[0].mxu0
      %v1198 = vadd.f32 0.0, %v1197
      %v1199 = vpop.f32.mrb[0].mxu0
      %v1200 = vpop.f32.mrb[0].mxu0
      %v1201 = vpop.f32.mrb[0].mxu0
      %1202 = vdwg.mxu0
      %1203 = vmatprep.subr.bf16.mxu0 0
      %1204 = vmatpush1.bf16.msra.mxu0 %v1121
      %1205 = vmatprep.subr.bf16.mxu0 0
      %1206 = vmatpush1.bf16.msra.mxu0 %v1122
      %1207 = vmatprep.subr.bf16.mxu0 0
      %1208 = vmatpush1.bf16.msra.mxu0 %v1123
      %1209 = vmatprep.subr.bf16.mxu0 0
      %1210 = vmatpush1.bf16.msra.mxu0 %v1124
      %1211 = vmatprep.subr.bf16.mxu0 0
      %1212 = vmatpush1.bf16.msra.mxu0 %v1125
      %1213 = vmatprep.subr.bf16.mxu0 0
      %1214 = vmatpush1.bf16.msra.mxu0 %v1126
      %1215 = vmatprep.subr.bf16.mxu0 0
      %1216 = vmatpush1.bf16.msra.mxu0 %v1127
      %1217 = vmatprep.subr.bf16.mxu0 0
      %1218 = vmatpush1.bf16.msra.mxu0 %v1128
      %1219 = vmatprep.subr.bf16.mxu0 0
      %1220 = vmatpush1.bf16.msra.mxu0 0
      %1221 = vmatprep.subr.bf16.mxu0 0
      %1222 = vmatpush1.bf16.msra.mxu0 0
      %1223 = vmatprep.subr.bf16.mxu0 0
      %1224 = vmatpush1.bf16.msra.mxu0 0
      %1225 = vmatprep.subr.bf16.mxu0 0
      %1226 = vmatpush1.bf16.msra.mxu0 0
      %1227 = vmatprep.subr.bf16.mxu0 0
      %1228 = vmatpush1.bf16.msra.mxu0 0
      %1229 = vmatprep.subr.bf16.mxu0 0
      %1230 = vmatpush1.bf16.msra.mxu0 0
      %1231 = vmatprep.subr.bf16.mxu0 0
      %1232 = vmatpush1.bf16.msra.mxu0 0
      %1233 = vmatprep.subr.bf16.mxu0 0
      %1234 = vmatpush1.bf16.msra.mxu0 0
      %1235 = vmatprep.mubr.bf16.mxu0 0
      %1236 = vmatmul.mubr.bf16.gmra.mrb[0].mxu0 %v1103
      %v1237 = vpop.f32.mrb[0].mxu0
      %v1238 = vadd.f32 %v1190, %v1237
      %v1239 = vpop.f32.mrb[0].mxu0
      %v1240 = vpop.f32.mrb[0].mxu0
      %v1241 = vadd.f32 %v1193, %v1240
      %v1242 = vpop.f32.mrb[0].mxu0
      %1243 = vmatprep.mubr.bf16.mxu0 0
      %1244 = vmatmul.mubr.bf16.gmra.mrb[0].mxu0 %v1104
      %v1245 = vpop.f32.mrb[0].mxu0
      %v1246 = vadd.f32 %v1198, %v1245
      %v1247 = vpop.f32.mrb[0].mxu0
      %v1248 = vpop.f32.mrb[0].mxu0
      %v1249 = vpop.f32.mrb[0].mxu0
      %1250 = vdwg.mxu0
      %v1251 = vld [vmem:[%s462] sm:$0x1]
      %v1253 = vlaneseq
      %v1254 = vshrl.u32 %v1253, 7
      %v1255 = vsub.s32 0, %v1254
      %v1256 = vrot.slane %v1251, %v1255
      %v1258 = vadd.f32 %v1238, %v1256
      %v1259 = vadd.f32 %v1241, %v1256
      %v1260 = vadd.f32 %v1246, %v1256
      %v1261 = vld [vmem:[%s468] sm:$0xff]
      %v1262 = vld [vmem:[%s468 + $0x8] sm:$0xff]
      %v1263 = vld [vmem:[%s468 + $0x10] sm:$0xff]
      %v1264 = vmax.f32 %v1258, 0.0
      %v1265 = vmax.f32 %v1259, 0.0
      %v1266 = vmax.f32 %v1260, 0.0
      %v1267 = vadd.f32 %v1261, %v1264
      %v1268 = vadd.f32 %v1262, %v1265
      %v1269 = vadd.f32 %v1263, %v1266
      %1270 = vst [vmem:[%s468] sm:$0xff] %v1267
      %1271 = vst [vmem:[%s468 + $0x8] sm:$0xff] %v1268
      %1272 = vst [vmem:[%s468 + $0x10] sm:$0xff] %v1269
      %s1273 = sld [smem:[#allocation3 + %s36]]
      %p1274 = scmp.lt.s32.totalorder %s1273, 2
      %s1275 = scalar_select %p1274, %s1273, 2
      %s1276 = smul.addr %s1275, 3
      %s1277 = smul.addr %s1276, 8
      %s1278 = scalar_lea.vmem %s11, %s1277
      // Predicated region
      $region57: #{all_graph_net_forward.2} parent=51 // pred_check
        %p1279 = pneg %p268
      $region58: #{all_graph_net_forward.2} parent=51 // pred_check_branch
        %1281 = sbr.rel (%p1279) target = $region60
      $region59: #{all_graph_net_forward.2} parent=51 // pred_region
        %s1282 = sld [smem:[#allocation3 + %s36]]
      $region60: #{all_graph_net_forward.2} parent=51 // pred_fallthru
        _
    $region52: #{all_graph_net_forward.2} parent=5 // pred_fallthru
      _
    %p1283 = scmp.le.s32.totalorder 2, %s31
    // Predicated region
    $region61: #{all_graph_net_forward.2} parent=5 // pred_check
      %p1284 = pneg %p1283
    $region62: #{all_graph_net_forward.2} parent=5 // pred_check_branch
      %1286 = sbr.rel (%p1284) target = $region64
    $region63: #{all_graph_net_forward.2} parent=5 // pred_region
      %s1287 = ssub.s32 %s31, 2
      // Predicated region
      $region65: #{all_graph_net_forward.2} parent=63 // pred_check
        %p1288 = pneg %p274
      $region66: #{all_graph_net_forward.2} parent=63 // pred_check_branch
        %1290 = sbr.rel (%p1288) target = $region68
      $region67: #{all_graph_net_forward.2} parent=63 // pred_region
        %s1291 = sld [smem:[#allocation3 + %s37]]
        %p1292 = scmp.lt.s32.totalorder %s1291, 2
        %s1293 = scalar_select %p1292, %s1291, 2
        %s1294 = smul.addr %s1293, 3
        %s1295 = smul.addr %s1294, 8
        %s1296 = scalar_lea.vmem %s11, %s1295
      $region68: #{all_graph_net_forward.2} parent=63 // pred_fallthru
        _
    $region64: #{all_graph_net_forward.2} parent=5 // pred_fallthru
      _
  $region6: #{all_graph_net_forward.2} parent=0 // loop_footer
    %s35 = sadd.s32 1, %s31
  $region7: #{all_graph_net_forward.2} parent=0 // loop_footer_branch
    %30 = sbr.rel target = $region3
  $region8: #{all_graph_net_forward.2} parent=0 // loop_exit
    _

</llo_original>
